<compile_context>
chip_gen: v7x
topology: tpu7x:2x2x1
jax: 0.10.0
libtpu: 0.0.40
codegen_flags: <defaults>
</compile_context>

<pallas_src>
import jax
import jax.numpy as jnp
from jax import lax
from jax.experimental import pallas as pl
from jax.experimental.pallas import tpu as pltpu


def lstm_fc_softmax_kernel(pg_ref, whh_ref, wfc_ref, bfc_ref, out_ref):
    """LSTM recurrence (input projection pre-hoisted) + mean-pool + fc + softmax.

    pg_ref:  (T, Bp, 4H)  input pre-gates (x_t @ W_ih^T + b), gate order [i,f,o,g]
    whh_ref: (H, 4H)      W_hh^T, gate order [i,f,o,g]
    wfc_ref: (H, C)       fc weight^T scaled by 1/T, zero-padded to C=128 lanes
    bfc_ref: (1, C)       fc bias, -1e30 in the padded class lanes
    out_ref: (Bp, C)      softmax probabilities (padded class lanes ~ 0)
    """
    T, B, fourH = pg_ref.shape
    H = whh_ref.shape[0]

    whh = whh_ref[...]                                     # (H, 4H), stays resident

    def step(t, carry):
        h, c, s = carry
        # Only serial dependency per step: h @ W_hh^T (MXU, f32).
        gates = pg_ref[t] + jnp.dot(h, whh,
                                    preferred_element_type=jnp.float32)  # (B, 4H)
        # Gate order is [i, f, o, g]: one contiguous sigmoid slab + one tanh.
        sig = jax.nn.sigmoid(gates[:, 0:3 * H])            # (B, 3H)
        i = sig[:, 0 * H:1 * H]
        f = sig[:, 1 * H:2 * H]
        o = sig[:, 2 * H:3 * H]
        g = jnp.tanh(gates[:, 3 * H:4 * H])
        c_new = f * c + i * g
        h_new = o * jnp.tanh(c_new)
        # Running sum for the mean-pool (off the h/c critical path).
        return h_new, c_new, s + h_new

    zeros = jnp.zeros((B, H), jnp.float32)
    _, _, h_sum = lax.fori_loop(0, T, step, (zeros, zeros, zeros), unroll=True)

    # AvgPool1d(kernel_size=T) == mean over T; the 1/T is folded into wfc.
    logits = (jnp.dot(h_sum, wfc_ref[...], preferred_element_type=jnp.float32)
              + bfc_ref[...])                              # (B, C)

    # Softmax over the class dim (padded lanes carry -1e30 -> exp ~ 0).
    m = jnp.max(logits, axis=-1, keepdims=True)
    e = jnp.exp(logits - m)
    denom = jnp.sum(e, axis=-1, keepdims=True)
    out_ref[...] = e * pl.reciprocal(denom, approx=True)


@jax.jit
def lstm_forward(tokens, embedding, w_ih, w_hh, b_ih, b_hh, w_fc, b_fc):
    """Full forward pass of the PyTorch `LSTM` module.

    tokens:    (B, T) int32
    embedding: (V, D)
    w_ih:      (4H, D)   PyTorch layout, gate order [i, f, g, o]
    w_hh:      (4H, H)
    b_ih,b_hh: (4H,)
    w_fc:      (2, H)
    b_fc:      (2,)
    returns:   (B, 1, 2) softmax probs
    """
    B, T = tokens.shape
    H = w_hh.shape[1]
    C = 128                                                # lane-dense fc width
    Bp = ((B + 7) // 8) * 8                                # pad batch to sublane width

    # Reorder gates [i, f, g, o] -> [i, f, o, g] so the kernel can apply one
    # contiguous sigmoid to the first 3H lanes and tanh to the last H lanes.
    perm = jnp.concatenate([
        jnp.arange(0 * H, 1 * H),
        jnp.arange(1 * H, 2 * H),
        jnp.arange(3 * H, 4 * H),
        jnp.arange(2 * H, 3 * H),
    ])
    w_ih_r = w_ih[perm].astype(jnp.float32)                # (4H, D)
    w_hh_r = w_hh[perm].astype(jnp.float32)                # (4H, H)
    bias_r = (b_ih + b_hh)[perm].astype(jnp.float32)       # (4H,)

    # Hoisted input projection: tiny (V, 4H) table, then a per-token gather.
    pre_table = (jnp.dot(embedding.astype(jnp.float32), w_ih_r.T,
                         preferred_element_type=jnp.float32)
                 + bias_r[None, :])                        # (V, 4H)
    pre_gates = jnp.take(pre_table, tokens, axis=0)        # (B, T, 4H)
    pre_gates_tm = jnp.transpose(pre_gates, (1, 0, 2))     # (T, B, 4H)
    pre_gates_tm = jnp.pad(pre_gates_tm,
                           ((0, 0), (0, Bp - B), (0, 0)))  # (T, Bp, 4H), zeros stay zero

    whh_t = jnp.transpose(w_hh_r)                          # (H, 4H)

    # Fold the 1/T mean-pool scale into the fc weight; pad classes to 128 lanes
    # (zero weights, -1e30 bias) so the kernel's store is full-lane and the
    # padded lanes drop out of the softmax.
    wfc_t = (jnp.transpose(w_fc) * (1.0 / T)).astype(jnp.float32)   # (H, 2)
    wfc_pad = jnp.zeros((H, C), jnp.float32).at[:, :2].set(wfc_t)   # (H, 128)
    bfc_pad = jnp.full((1, C), -1e30, jnp.float32).at[0, :2].set(
        b_fc.astype(jnp.float32))                                   # (1, 128)

    # TODO(synk): on v6e/v7x, casting whh_t / pre_gates to bf16 (f32 accumulate)
    # would halve MXU feed cost, but would also require loosening the numerical
    # tolerance; kept f32 here.

    vmem = pl.BlockSpec(memory_space=pltpu.MemorySpace.VMEM)
    out = pl.pallas_call(
        lstm_fc_softmax_kernel,
        out_shape=jax.ShapeDtypeStruct((Bp, C), jnp.float32),
        in_specs=[vmem] * 4,
        out_specs=vmem,
    )(pre_gates_tm, whh_t, wfc_pad, bfc_pad)

    return out[:B, :2].reshape(B, 1, 2)


def reference_forward(tokens, embedding, w_ih, w_hh, b_ih, b_hh, w_fc, b_fc):
    """Pure-JAX reference matching PyTorch semantics."""
    B, T = tokens.shape
    H = w_hh.shape[1]
    emb = jnp.take(embedding, tokens, axis=0)              # (B, T, D)
    h = jnp.zeros((B, H), jnp.float32)
    c = jnp.zeros((B, H), jnp.float32)
    hs = []
    for t in range(T):
        gates = emb[:, t, :] @ w_ih.T + b_ih + h @ w_hh.T + b_hh
        i = jax.nn.sigmoid(gates[:, 0 * H:1 * H])
        f = jax.nn.sigmoid(gates[:, 1 * H:2 * H])
        g = jnp.tanh(gates[:, 2 * H:3 * H])
        o = jax.nn.sigmoid(gates[:, 3 * H:4 * H])
        c = f * c + i * g
        h = o * jnp.tanh(c)
        hs.append(h)
    pooled = jnp.mean(jnp.stack(hs, axis=1), axis=1, keepdims=True)  # (B,1,H)
    logits = pooled @ w_fc.T + b_fc                                   # (B,1,2)
    return jax.nn.softmax(logits, axis=2)


if __name__ == "__main__":
    # Module hyperparameters (small, consistent with the forward pass).
    vocab_size = 50
    word_dim = 64
    sentence_length = 8
    batch = 2
    hidden = word_dim * 2  # 128

    key = jax.random.PRNGKey(0)
    ks = jax.random.split(key, 8)

    tokens = jax.random.randint(ks[0], (batch, sentence_length), 0, vocab_size,
                                dtype=jnp.int32)
    embedding = jax.random.normal(ks[1], (vocab_size, word_dim), jnp.float32)

    scale = 1.0 / jnp.sqrt(hidden)
    w_ih = jax.random.uniform(ks[2], (4 * hidden, word_dim), jnp.float32,
                              -scale, scale)
    w_hh = jax.random.uniform(ks[3], (4 * hidden, hidden), jnp.float32,
                              -scale, scale)
    b_ih = jax.random.uniform(ks[4], (4 * hidden,), jnp.float32, -scale, scale)
    b_hh = jax.random.uniform(ks[5], (4 * hidden,), jnp.float32, -scale, scale)
    w_fc = jax.random.uniform(ks[6], (2, hidden), jnp.float32, -scale, scale)
    b_fc = jax.random.uniform(ks[7], (2,), jnp.float32, -scale, scale)

    out = lstm_forward(tokens, embedding, w_ih, w_hh, b_ih, b_hh, w_fc, b_fc)
    out = jax.block_until_ready(out)

    ref = reference_forward(tokens, embedding, w_ih, w_hh, b_ih, b_hh,
                            w_fc, b_fc)
    assert out.shape == (batch, 1, 2), out.shape
    # Tolerance accounts for the EUP approximate reciprocal in the softmax.
    assert jnp.allclose(out, ref, atol=1e-3, rtol=1e-3), (out, ref)

    print("KERNEL_OK")
</pallas_src>

<mosaic_0001>
module attributes {stable_mosaic.version = 11 : i64} {
  func.func @lstm_fc_softmax_kernel(%arg0: memref<8x8x512xf32, #tpu.memory_space<vmem>>, %arg1: memref<128x512xf32, #tpu.memory_space<vmem>>, %arg2: memref<128x128xf32, #tpu.memory_space<vmem>>, %arg3: memref<1x128xf32, #tpu.memory_space<vmem>>, %arg4: memref<8x128xf32, #tpu.memory_space<vmem>>) attributes {dimension_semantics = [], scalar_prefetch = 0 : i64, scratch_operands = 0 : i64, tpu.core_type = #tpu.core_type<tc>} {
    %c0 = arith.constant 0 : index
    %c0_0 = arith.constant 0 : index
    %0 = vector.load %arg1[%c0, %c0_0] : memref<128x512xf32, #tpu.memory_space<vmem>>, vector<128x512xf32>
    %cst = arith.constant 0.000000e+00 : f32
    %1 = vector.broadcast %cst : f32 to vector<8x128xf32>
    %c0_i32 = arith.constant 0 : i32
    %2 = arith.index_cast %c0_i32 : i32 to index
    %c0_1 = arith.constant 0 : index
    %c0_2 = arith.constant 0 : index
    %3 = vector.load %arg0[%2, %c0_1, %c0_2] : memref<8x8x512xf32, #tpu.memory_space<vmem>>, vector<1x8x512xf32>
    %4 = vector.shape_cast %3 : vector<1x8x512xf32> to vector<8x512xf32>
    %cst_3 = arith.constant dense<0.000000e+00> : vector<8x512xf32>
    %5 = tpu.matmul %1, %0, %cst_3 {dimension_numbers = #tpu.dot_dimension_numbers<[1], [0], [0], [1], [0, 0, 1, 1], [], []>} : vector<8x128xf32>, vector<128x512xf32>, vector<8x512xf32> -> vector<8x512xf32>
    %6 = arith.addf %4, %5 : vector<8x512xf32>
    %7 = vector.extract_strided_slice %6 {offsets = [0, 0], sizes = [8, 384], strides = [1, 1]} : vector<8x512xf32> to vector<8x384xf32>
    %8 = arith.negf %7 : vector<8x384xf32>
    %9 = math.exp %8 : vector<8x384xf32>
    %cst_4 = arith.constant 1.000000e+00 : f32
    %10 = vector.broadcast %cst_4 : f32 to vector<8x384xf32>
    %11 = arith.addf %10, %9 : vector<8x384xf32>
    %12 = arith.divf %10, %11 : vector<8x384xf32>
    %13 = vector.extract_strided_slice %12 {offsets = [0, 0], sizes = [8, 128], strides = [1, 1]} : vector<8x384xf32> to vector<8x128xf32>
    %14 = vector.extract_strided_slice %12 {offsets = [0, 128], sizes = [8, 128], strides = [1, 1]} : vector<8x384xf32> to vector<8x128xf32>
    %15 = vector.extract_strided_slice %12 {offsets = [0, 256], sizes = [8, 128], strides = [1, 1]} : vector<8x384xf32> to vector<8x128xf32>
    %16 = vector.extract_strided_slice %6 {offsets = [0, 384], sizes = [8, 128], strides = [1, 1]} : vector<8x512xf32> to vector<8x128xf32>
    %17 = math.tanh %16 : vector<8x128xf32>
    %18 = arith.mulf %14, %1 : vector<8x128xf32>
    %19 = arith.mulf %13, %17 : vector<8x128xf32>
    %20 = arith.addf %18, %19 : vector<8x128xf32>
    %21 = math.tanh %20 : vector<8x128xf32>
    %22 = arith.mulf %15, %21 : vector<8x128xf32>
    %23 = arith.addf %1, %22 : vector<8x128xf32>
    %c1_i32 = arith.constant 1 : i32
    %24 = arith.index_cast %c1_i32 : i32 to index
    %c0_5 = arith.constant 0 : index
    %c0_6 = arith.constant 0 : index
    %25 = vector.load %arg0[%24, %c0_5, %c0_6] : memref<8x8x512xf32, #tpu.memory_space<vmem>>, vector<1x8x512xf32>
    %26 = vector.shape_cast %25 : vector<1x8x512xf32> to vector<8x512xf32>
    %cst_7 = arith.constant dense<0.000000e+00> : vector<8x512xf32>
    %27 = tpu.matmul %22, %0, %cst_7 {dimension_numbers = #tpu.dot_dimension_numbers<[1], [0], [0], [1], [0, 0, 1, 1], [], []>} : vector<8x128xf32>, vector<128x512xf32>, vector<8x512xf32> -> vector<8x512xf32>
    %28 = arith.addf %26, %27 : vector<8x512xf32>
    %29 = vector.extract_strided_slice %28 {offsets = [0, 0], sizes = [8, 384], strides = [1, 1]} : vector<8x512xf32> to vector<8x384xf32>
    %30 = arith.negf %29 : vector<8x384xf32>
    %31 = math.exp %30 : vector<8x384xf32>
    %cst_8 = arith.constant 1.000000e+00 : f32
    %32 = vector.broadcast %cst_8 : f32 to vector<8x384xf32>
    %33 = arith.addf %32, %31 : vector<8x384xf32>
    %34 = arith.divf %32, %33 : vector<8x384xf32>
    %35 = vector.extract_strided_slice %34 {offsets = [0, 0], sizes = [8, 128], strides = [1, 1]} : vector<8x384xf32> to vector<8x128xf32>
    %36 = vector.extract_strided_slice %34 {offsets = [0, 128], sizes = [8, 128], strides = [1, 1]} : vector<8x384xf32> to vector<8x128xf32>
    %37 = vector.extract_strided_slice %34 {offsets = [0, 256], sizes = [8, 128], strides = [1, 1]} : vector<8x384xf32> to vector<8x128xf32>
    %38 = vector.extract_strided_slice %28 {offsets = [0, 384], sizes = [8, 128], strides = [1, 1]} : vector<8x512xf32> to vector<8x128xf32>
    %39 = math.tanh %38 : vector<8x128xf32>
    %40 = arith.mulf %36, %20 : vector<8x128xf32>
    %41 = arith.mulf %35, %39 : vector<8x128xf32>
    %42 = arith.addf %40, %41 : vector<8x128xf32>
    %43 = math.tanh %42 : vector<8x128xf32>
    %44 = arith.mulf %37, %43 : vector<8x128xf32>
    %45 = arith.addf %23, %44 : vector<8x128xf32>
    %c2_i32 = arith.constant 2 : i32
    %46 = arith.index_cast %c2_i32 : i32 to index
    %c0_9 = arith.constant 0 : index
    %c0_10 = arith.constant 0 : index
    %47 = vector.load %arg0[%46, %c0_9, %c0_10] : memref<8x8x512xf32, #tpu.memory_space<vmem>>, vector<1x8x512xf32>
    %48 = vector.shape_cast %47 : vector<1x8x512xf32> to vector<8x512xf32>
    %cst_11 = arith.constant dense<0.000000e+00> : vector<8x512xf32>
    %49 = tpu.matmul %44, %0, %cst_11 {dimension_numbers = #tpu.dot_dimension_numbers<[1], [0], [0], [1], [0, 0, 1, 1], [], []>} : vector<8x128xf32>, vector<128x512xf32>, vector<8x512xf32> -> vector<8x512xf32>
    %50 = arith.addf %48, %49 : vector<8x512xf32>
    %51 = vector.extract_strided_slice %50 {offsets = [0, 0], sizes = [8, 384], strides = [1, 1]} : vector<8x512xf32> to vector<8x384xf32>
    %52 = arith.negf %51 : vector<8x384xf32>
    %53 = math.exp %52 : vector<8x384xf32>
    %cst_12 = arith.constant 1.000000e+00 : f32
    %54 = vector.broadcast %cst_12 : f32 to vector<8x384xf32>
    %55 = arith.addf %54, %53 : vector<8x384xf32>
    %56 = arith.divf %54, %55 : vector<8x384xf32>
    %57 = vector.extract_strided_slice %56 {offsets = [0, 0], sizes = [8, 128], strides = [1, 1]} : vector<8x384xf32> to vector<8x128xf32>
    %58 = vector.extract_strided_slice %56 {offsets = [0, 128], sizes = [8, 128], strides = [1, 1]} : vector<8x384xf32> to vector<8x128xf32>
    %59 = vector.extract_strided_slice %56 {offsets = [0, 256], sizes = [8, 128], strides = [1, 1]} : vector<8x384xf32> to vector<8x128xf32>
    %60 = vector.extract_strided_slice %50 {offsets = [0, 384], sizes = [8, 128], strides = [1, 1]} : vector<8x512xf32> to vector<8x128xf32>
    %61 = math.tanh %60 : vector<8x128xf32>
    %62 = arith.mulf %58, %42 : vector<8x128xf32>
    %63 = arith.mulf %57, %61 : vector<8x128xf32>
    %64 = arith.addf %62, %63 : vector<8x128xf32>
    %65 = math.tanh %64 : vector<8x128xf32>
    %66 = arith.mulf %59, %65 : vector<8x128xf32>
    %67 = arith.addf %45, %66 : vector<8x128xf32>
    %c3_i32 = arith.constant 3 : i32
    %68 = arith.index_cast %c3_i32 : i32 to index
    %c0_13 = arith.constant 0 : index
    %c0_14 = arith.constant 0 : index
    %69 = vector.load %arg0[%68, %c0_13, %c0_14] : memref<8x8x512xf32, #tpu.memory_space<vmem>>, vector<1x8x512xf32>
    %70 = vector.shape_cast %69 : vector<1x8x512xf32> to vector<8x512xf32>
    %cst_15 = arith.constant dense<0.000000e+00> : vector<8x512xf32>
    %71 = tpu.matmul %66, %0, %cst_15 {dimension_numbers = #tpu.dot_dimension_numbers<[1], [0], [0], [1], [0, 0, 1, 1], [], []>} : vector<8x128xf32>, vector<128x512xf32>, vector<8x512xf32> -> vector<8x512xf32>
    %72 = arith.addf %70, %71 : vector<8x512xf32>
    %73 = vector.extract_strided_slice %72 {offsets = [0, 0], sizes = [8, 384], strides = [1, 1]} : vector<8x512xf32> to vector<8x384xf32>
    %74 = arith.negf %73 : vector<8x384xf32>
    %75 = math.exp %74 : vector<8x384xf32>
    %cst_16 = arith.constant 1.000000e+00 : f32
    %76 = vector.broadcast %cst_16 : f32 to vector<8x384xf32>
    %77 = arith.addf %76, %75 : vector<8x384xf32>
    %78 = arith.divf %76, %77 : vector<8x384xf32>
    %79 = vector.extract_strided_slice %78 {offsets = [0, 0], sizes = [8, 128], strides = [1, 1]} : vector<8x384xf32> to vector<8x128xf32>
    %80 = vector.extract_strided_slice %78 {offsets = [0, 128], sizes = [8, 128], strides = [1, 1]} : vector<8x384xf32> to vector<8x128xf32>
    %81 = vector.extract_strided_slice %78 {offsets = [0, 256], sizes = [8, 128], strides = [1, 1]} : vector<8x384xf32> to vector<8x128xf32>
    %82 = vector.extract_strided_slice %72 {offsets = [0, 384], sizes = [8, 128], strides = [1, 1]} : vector<8x512xf32> to vector<8x128xf32>
    %83 = math.tanh %82 : vector<8x128xf32>
    %84 = arith.mulf %80, %64 : vector<8x128xf32>
    %85 = arith.mulf %79, %83 : vector<8x128xf32>
    %86 = arith.addf %84, %85 : vector<8x128xf32>
    %87 = math.tanh %86 : vector<8x128xf32>
    %88 = arith.mulf %81, %87 : vector<8x128xf32>
    %89 = arith.addf %67, %88 : vector<8x128xf32>
    %c4_i32 = arith.constant 4 : i32
    %90 = arith.index_cast %c4_i32 : i32 to index
    %c0_17 = arith.constant 0 : index
    %c0_18 = arith.constant 0 : index
    %91 = vector.load %arg0[%90, %c0_17, %c0_18] : memref<8x8x512xf32, #tpu.memory_space<vmem>>, vector<1x8x512xf32>
    %92 = vector.shape_cast %91 : vector<1x8x512xf32> to vector<8x512xf32>
    %cst_19 = arith.constant dense<0.000000e+00> : vector<8x512xf32>
    %93 = tpu.matmul %88, %0, %cst_19 {dimension_numbers = #tpu.dot_dimension_numbers<[1], [0], [0], [1], [0, 0, 1, 1], [], []>} : vector<8x128xf32>, vector<128x512xf32>, vector<8x512xf32> -> vector<8x512xf32>
    %94 = arith.addf %92, %93 : vector<8x512xf32>
    %95 = vector.extract_strided_slice %94 {offsets = [0, 0], sizes = [8, 384], strides = [1, 1]} : vector<8x512xf32> to vector<8x384xf32>
    %96 = arith.negf %95 : vector<8x384xf32>
    %97 = math.exp %96 : vector<8x384xf32>
    %cst_20 = arith.constant 1.000000e+00 : f32
    %98 = vector.broadcast %cst_20 : f32 to vector<8x384xf32>
    %99 = arith.addf %98, %97 : vector<8x384xf32>
    %100 = arith.divf %98, %99 : vector<8x384xf32>
    %101 = vector.extract_strided_slice %100 {offsets = [0, 0], sizes = [8, 128], strides = [1, 1]} : vector<8x384xf32> to vector<8x128xf32>
    %102 = vector.extract_strided_slice %100 {offsets = [0, 128], sizes = [8, 128], strides = [1, 1]} : vector<8x384xf32> to vector<8x128xf32>
    %103 = vector.extract_strided_slice %100 {offsets = [0, 256], sizes = [8, 128], strides = [1, 1]} : vector<8x384xf32> to vector<8x128xf32>
    %104 = vector.extract_strided_slice %94 {offsets = [0, 384], sizes = [8, 128], strides = [1, 1]} : vector<8x512xf32> to vector<8x128xf32>
    %105 = math.tanh %104 : vector<8x128xf32>
    %106 = arith.mulf %102, %86 : vector<8x128xf32>
    %107 = arith.mulf %101, %105 : vector<8x128xf32>
    %108 = arith.addf %106, %107 : vector<8x128xf32>
    %109 = math.tanh %108 : vector<8x128xf32>
    %110 = arith.mulf %103, %109 : vector<8x128xf32>
    %111 = arith.addf %89, %110 : vector<8x128xf32>
    %c5_i32 = arith.constant 5 : i32
    %112 = arith.index_cast %c5_i32 : i32 to index
    %c0_21 = arith.constant 0 : index
    %c0_22 = arith.constant 0 : index
    %113 = vector.load %arg0[%112, %c0_21, %c0_22] : memref<8x8x512xf32, #tpu.memory_space<vmem>>, vector<1x8x512xf32>
    %114 = vector.shape_cast %113 : vector<1x8x512xf32> to vector<8x512xf32>
    %cst_23 = arith.constant dense<0.000000e+00> : vector<8x512xf32>
    %115 = tpu.matmul %110, %0, %cst_23 {dimension_numbers = #tpu.dot_dimension_numbers<[1], [0], [0], [1], [0, 0, 1, 1], [], []>} : vector<8x128xf32>, vector<128x512xf32>, vector<8x512xf32> -> vector<8x512xf32>
    %116 = arith.addf %114, %115 : vector<8x512xf32>
    %117 = vector.extract_strided_slice %116 {offsets = [0, 0], sizes = [8, 384], strides = [1, 1]} : vector<8x512xf32> to vector<8x384xf32>
    %118 = arith.negf %117 : vector<8x384xf32>
    %119 = math.exp %118 : vector<8x384xf32>
    %cst_24 = arith.constant 1.000000e+00 : f32
    %120 = vector.broadcast %cst_24 : f32 to vector<8x384xf32>
    %121 = arith.addf %120, %119 : vector<8x384xf32>
    %122 = arith.divf %120, %121 : vector<8x384xf32>
    %123 = vector.extract_strided_slice %122 {offsets = [0, 0], sizes = [8, 128], strides = [1, 1]} : vector<8x384xf32> to vector<8x128xf32>
    %124 = vector.extract_strided_slice %122 {offsets = [0, 128], sizes = [8, 128], strides = [1, 1]} : vector<8x384xf32> to vector<8x128xf32>
    %125 = vector.extract_strided_slice %122 {offsets = [0, 256], sizes = [8, 128], strides = [1, 1]} : vector<8x384xf32> to vector<8x128xf32>
    %126 = vector.extract_strided_slice %116 {offsets = [0, 384], sizes = [8, 128], strides = [1, 1]} : vector<8x512xf32> to vector<8x128xf32>
    %127 = math.tanh %126 : vector<8x128xf32>
    %128 = arith.mulf %124, %108 : vector<8x128xf32>
    %129 = arith.mulf %123, %127 : vector<8x128xf32>
    %130 = arith.addf %128, %129 : vector<8x128xf32>
    %131 = math.tanh %130 : vector<8x128xf32>
    %132 = arith.mulf %125, %131 : vector<8x128xf32>
    %133 = arith.addf %111, %132 : vector<8x128xf32>
    %c6_i32 = arith.constant 6 : i32
    %134 = arith.index_cast %c6_i32 : i32 to index
    %c0_25 = arith.constant 0 : index
    %c0_26 = arith.constant 0 : index
    %135 = vector.load %arg0[%134, %c0_25, %c0_26] : memref<8x8x512xf32, #tpu.memory_space<vmem>>, vector<1x8x512xf32>
    %136 = vector.shape_cast %135 : vector<1x8x512xf32> to vector<8x512xf32>
    %cst_27 = arith.constant dense<0.000000e+00> : vector<8x512xf32>
    %137 = tpu.matmul %132, %0, %cst_27 {dimension_numbers = #tpu.dot_dimension_numbers<[1], [0], [0], [1], [0, 0, 1, 1], [], []>} : vector<8x128xf32>, vector<128x512xf32>, vector<8x512xf32> -> vector<8x512xf32>
    %138 = arith.addf %136, %137 : vector<8x512xf32>
    %139 = vector.extract_strided_slice %138 {offsets = [0, 0], sizes = [8, 384], strides = [1, 1]} : vector<8x512xf32> to vector<8x384xf32>
    %140 = arith.negf %139 : vector<8x384xf32>
    %141 = math.exp %140 : vector<8x384xf32>
    %cst_28 = arith.constant 1.000000e+00 : f32
    %142 = vector.broadcast %cst_28 : f32 to vector<8x384xf32>
    %143 = arith.addf %142, %141 : vector<8x384xf32>
    %144 = arith.divf %142, %143 : vector<8x384xf32>
    %145 = vector.extract_strided_slice %144 {offsets = [0, 0], sizes = [8, 128], strides = [1, 1]} : vector<8x384xf32> to vector<8x128xf32>
    %146 = vector.extract_strided_slice %144 {offsets = [0, 128], sizes = [8, 128], strides = [1, 1]} : vector<8x384xf32> to vector<8x128xf32>
    %147 = vector.extract_strided_slice %144 {offsets = [0, 256], sizes = [8, 128], strides = [1, 1]} : vector<8x384xf32> to vector<8x128xf32>
    %148 = vector.extract_strided_slice %138 {offsets = [0, 384], sizes = [8, 128], strides = [1, 1]} : vector<8x512xf32> to vector<8x128xf32>
    %149 = math.tanh %148 : vector<8x128xf32>
    %150 = arith.mulf %146, %130 : vector<8x128xf32>
    %151 = arith.mulf %145, %149 : vector<8x128xf32>
    %152 = arith.addf %150, %151 : vector<8x128xf32>
    %153 = math.tanh %152 : vector<8x128xf32>
    %154 = arith.mulf %147, %153 : vector<8x128xf32>
    %155 = arith.addf %133, %154 : vector<8x128xf32>
    %c7_i32 = arith.constant 7 : i32
    %156 = arith.index_cast %c7_i32 : i32 to index
    %c0_29 = arith.constant 0 : index
    %c0_30 = arith.constant 0 : index
    %157 = vector.load %arg0[%156, %c0_29, %c0_30] : memref<8x8x512xf32, #tpu.memory_space<vmem>>, vector<1x8x512xf32>
    %158 = vector.shape_cast %157 : vector<1x8x512xf32> to vector<8x512xf32>
    %cst_31 = arith.constant dense<0.000000e+00> : vector<8x512xf32>
    %159 = tpu.matmul %154, %0, %cst_31 {dimension_numbers = #tpu.dot_dimension_numbers<[1], [0], [0], [1], [0, 0, 1, 1], [], []>} : vector<8x128xf32>, vector<128x512xf32>, vector<8x512xf32> -> vector<8x512xf32>
    %160 = arith.addf %158, %159 : vector<8x512xf32>
    %161 = vector.extract_strided_slice %160 {offsets = [0, 0], sizes = [8, 384], strides = [1, 1]} : vector<8x512xf32> to vector<8x384xf32>
    %162 = arith.negf %161 : vector<8x384xf32>
    %163 = math.exp %162 : vector<8x384xf32>
    %cst_32 = arith.constant 1.000000e+00 : f32
    %164 = vector.broadcast %cst_32 : f32 to vector<8x384xf32>
    %165 = arith.addf %164, %163 : vector<8x384xf32>
    %166 = arith.divf %164, %165 : vector<8x384xf32>
    %167 = vector.extract_strided_slice %166 {offsets = [0, 0], sizes = [8, 128], strides = [1, 1]} : vector<8x384xf32> to vector<8x128xf32>
    %168 = vector.extract_strided_slice %166 {offsets = [0, 128], sizes = [8, 128], strides = [1, 1]} : vector<8x384xf32> to vector<8x128xf32>
    %169 = vector.extract_strided_slice %166 {offsets = [0, 256], sizes = [8, 128], strides = [1, 1]} : vector<8x384xf32> to vector<8x128xf32>
    %170 = vector.extract_strided_slice %160 {offsets = [0, 384], sizes = [8, 128], strides = [1, 1]} : vector<8x512xf32> to vector<8x128xf32>
    %171 = math.tanh %170 : vector<8x128xf32>
    %172 = arith.mulf %168, %152 : vector<8x128xf32>
    %173 = arith.mulf %167, %171 : vector<8x128xf32>
    %174 = arith.addf %172, %173 : vector<8x128xf32>
    %175 = math.tanh %174 : vector<8x128xf32>
    %176 = arith.mulf %169, %175 : vector<8x128xf32>
    %177 = arith.addf %155, %176 : vector<8x128xf32>
    %c8_i32 = arith.constant 8 : i32
    %c0_33 = arith.constant 0 : index
    %c0_34 = arith.constant 0 : index
    %178 = vector.load %arg2[%c0_33, %c0_34] : memref<128x128xf32, #tpu.memory_space<vmem>>, vector<128x128xf32>
    %cst_35 = arith.constant dense<0.000000e+00> : vector<8x128xf32>
    %179 = tpu.matmul %177, %178, %cst_35 {dimension_numbers = #tpu.dot_dimension_numbers<[1], [0], [0], [1], [0, 0, 1, 1], [], []>} : vector<8x128xf32>, vector<128x128xf32>, vector<8x128xf32> -> vector<8x128xf32>
    %c0_36 = arith.constant 0 : index
    %c0_37 = arith.constant 0 : index
    %180 = vector.load %arg3[%c0_36, %c0_37] : memref<1x128xf32, #tpu.memory_space<vmem>>, vector<1x128xf32>
    %181 = vector.broadcast %180 : vector<1x128xf32> to vector<8x128xf32>
    %182 = arith.addf %179, %181 : vector<8x128xf32>
    %cst_38 = arith.constant dense<0xFF800000> : vector<8xf32>
    %183 = vector.multi_reduction <maximumf>, %182, %cst_38 [1] : vector<8x128xf32> to vector<8xf32>
    %184 = vector.shape_cast %183 : vector<8xf32> to vector<8x1xf32>
    %185 = vector.broadcast %184 : vector<8x1xf32> to vector<8x128xf32>
    %186 = arith.subf %182, %185 : vector<8x128xf32>
    %187 = math.exp %186 : vector<8x128xf32>
    %cst_39 = arith.constant dense<0.000000e+00> : vector<8xf32>
    %188 = vector.multi_reduction <add>, %187, %cst_39 [1] : vector<8x128xf32> to vector<8xf32>
    %189 = vector.shape_cast %188 : vector<8xf32> to vector<8x1xf32>
    %190 = tpu.reciprocal %189 {approx = true} : vector<8x1xf32> -> vector<8x1xf32>
    %191 = vector.broadcast %190 : vector<8x1xf32> to vector<8x128xf32>
    %192 = arith.mulf %187, %191 : vector<8x128xf32>
    %c0_40 = arith.constant 0 : index
    %c0_41 = arith.constant 0 : index
    %193 = vector.load %arg4[%c0_40, %c0_41] : memref<8x128xf32, #tpu.memory_space<vmem>>, vector<8x128xf32>
    tpu.vector_store %arg4[%c0_40, %c0_41], %192 {strides = array<i32>} : memref<8x128xf32, #tpu.memory_space<vmem>>, vector<8x128xf32>,
    return
  }
}

</mosaic_0001>

<llo_original>
// kernel: lstm_forward.1
$region0: #{lstm_forward.1}
  #allocation0 [shape = 'u32[]', space=smem, size = 0x4, offset = 0x4, fixed_abs, tag = 'smem constant byte address 0x4 - core index']
  #allocation1 [shape = 'u32[144,128]{1,0:T(1,128)}', space=vmem, size = 0x12000, scoped, tag = 'internal scratch']
  %s0 = inlined_call_operand.vmem [shape: f32[8,8,512], index: 0, kind: input, shape index: {}]
  %s1 = inlined_call_operand.vmem [shape: f32[128,512], index: 1, kind: input, shape index: {}]
  %s2 = inlined_call_operand.vmem [shape: f32[128,128], index: 2, kind: input, shape index: {}]
  %s3 = inlined_call_operand.vmem [shape: f32[1,128], index: 3, kind: input, shape index: {}]
  %s4 = inlined_call_operand.vmem [shape: f32[8,128], index: 4, kind: output, shape index: {}]
  %s5 = sld [smem:[#allocation0]]
  $region26: #{lstm_forward.1} parent=0
    _
  %s7 = ssub.s32 1, %s5
  %s8 = scalar_select 0, %s7, %s5
  // Predicated region
  $region2: #{lstm_forward.1} parent=0 // pred_check
    _
  $region3: #{lstm_forward.1} parent=0 // pred_check_branch
    %10 = sbr.rel (0) target = $region5
  $region4: #{lstm_forward.1} parent=0 // pred_region
    _
  $region5: #{lstm_forward.1} parent=0 // pred_fallthru
    _
  // Predicated region
  $region6: #{lstm_forward.1} parent=0 // pred_check
    _
  $region7: #{lstm_forward.1} parent=0 // pred_check_branch
    %12 = sbr.rel (0) target = $region9
  $region8: #{lstm_forward.1} parent=0 // pred_region
    _
  $region9: #{lstm_forward.1} parent=0 // pred_fallthru
    _
  // Predicated region
  $region10: #{lstm_forward.1} parent=0 // pred_check
    _
  $region11: #{lstm_forward.1} parent=0 // pred_check_branch
    %14 = sbr.rel (0) target = $region13
  $region12: #{lstm_forward.1} parent=0 // pred_region
    _
  $region13: #{lstm_forward.1} parent=0 // pred_fallthru
    _
  // Predicated region
  $region14: #{lstm_forward.1} parent=0 // pred_check
    _
  $region15: #{lstm_forward.1} parent=0 // pred_check_branch
    %16 = sbr.rel (0) target = $region17
  $region16: #{lstm_forward.1} parent=0 // pred_region
    _
  $region17: #{lstm_forward.1} parent=0 // pred_fallthru
    _
  %v17 = vld [vmem:[%s1] sm:$0xff]
  %v18 = vld [vmem:[%s1 + $0x8] sm:$0xff]
  %v19 = vld [vmem:[%s1 + $0x10] sm:$0xff]
  %v20 = vld [vmem:[%s1 + $0x18] sm:$0xff]
  %v21 = vld [vmem:[%s1 + $0x20] sm:$0xff]
  %v22 = vld [vmem:[%s1 + $0x28] sm:$0xff]
  %v23 = vld [vmem:[%s1 + $0x30] sm:$0xff]
  %v24 = vld [vmem:[%s1 + $0x38] sm:$0xff]
  %v25 = vld [vmem:[%s1 + $0x40] sm:$0xff]
  %v26 = vld [vmem:[%s1 + $0x48] sm:$0xff]
  %v27 = vld [vmem:[%s1 + $0x50] sm:$0xff]
  %v28 = vld [vmem:[%s1 + $0x58] sm:$0xff]
  %v29 = vld [vmem:[%s1 + $0x60] sm:$0xff]
  %v30 = vld [vmem:[%s1 + $0x68] sm:$0xff]
  %v31 = vld [vmem:[%s1 + $0x70] sm:$0xff]
  %v32 = vld [vmem:[%s1 + $0x78] sm:$0xff]
  %v33 = vld [vmem:[%s1 + $0x80] sm:$0xff]
  %v34 = vld [vmem:[%s1 + $0x88] sm:$0xff]
  %v35 = vld [vmem:[%s1 + $0x90] sm:$0xff]
  %v36 = vld [vmem:[%s1 + $0x98] sm:$0xff]
  %v37 = vld [vmem:[%s1 + $0xa0] sm:$0xff]
  %v38 = vld [vmem:[%s1 + $0xa8] sm:$0xff]
  %v39 = vld [vmem:[%s1 + $0xb0] sm:$0xff]
  %v40 = vld [vmem:[%s1 + $0xb8] sm:$0xff]
  %v41 = vld [vmem:[%s1 + $0xc0] sm:$0xff]
  %v42 = vld [vmem:[%s1 + $0xc8] sm:$0xff]
  %v43 = vld [vmem:[%s1 + $0xd0] sm:$0xff]
  %v44 = vld [vmem:[%s1 + $0xd8] sm:$0xff]
  %v45 = vld [vmem:[%s1 + $0xe0] sm:$0xff]
  %v46 = vld [vmem:[%s1 + $0xe8] sm:$0xff]
  %v47 = vld [vmem:[%s1 + $0xf0] sm:$0xff]
  %v48 = vld [vmem:[%s1 + $0xf8] sm:$0xff]
  %v49 = vld [vmem:[%s1 + $0x100] sm:$0xff]
  %v50 = vld [vmem:[%s1 + $0x108] sm:$0xff]
  %v51 = vld [vmem:[%s1 + $0x110] sm:$0xff]
  %v52 = vld [vmem:[%s1 + $0x118] sm:$0xff]
  %v53 = vld [vmem:[%s1 + $0x120] sm:$0xff]
  %v54 = vld [vmem:[%s1 + $0x128] sm:$0xff]
  %v55 = vld [vmem:[%s1 + $0x130] sm:$0xff]
  %v56 = vld [vmem:[%s1 + $0x138] sm:$0xff]
  %v57 = vld [vmem:[%s1 + $0x140] sm:$0xff]
  %v58 = vld [vmem:[%s1 + $0x148] sm:$0xff]
  %v59 = vld [vmem:[%s1 + $0x150] sm:$0xff]
  %v60 = vld [vmem:[%s1 + $0x158] sm:$0xff]
  %v61 = vld [vmem:[%s1 + $0x160] sm:$0xff]
  %v62 = vld [vmem:[%s1 + $0x168] sm:$0xff]
  %v63 = vld [vmem:[%s1 + $0x170] sm:$0xff]
  %v64 = vld [vmem:[%s1 + $0x178] sm:$0xff]
  %v65 = vld [vmem:[%s1 + $0x180] sm:$0xff]
  %v66 = vld [vmem:[%s1 + $0x188] sm:$0xff]
  %v67 = vld [vmem:[%s1 + $0x190] sm:$0xff]
  %v68 = vld [vmem:[%s1 + $0x198] sm:$0xff]
  %v69 = vld [vmem:[%s1 + $0x1a0] sm:$0xff]
  %v70 = vld [vmem:[%s1 + $0x1a8] sm:$0xff]
  %v71 = vld [vmem:[%s1 + $0x1b0] sm:$0xff]
  %v72 = vld [vmem:[%s1 + $0x1b8] sm:$0xff]
  %v73 = vld [vmem:[%s1 + $0x1c0] sm:$0xff]
  %v74 = vld [vmem:[%s1 + $0x1c8] sm:$0xff]
  %v75 = vld [vmem:[%s1 + $0x1d0] sm:$0xff]
  %v76 = vld [vmem:[%s1 + $0x1d8] sm:$0xff]
  %v77 = vld [vmem:[%s1 + $0x1e0] sm:$0xff]
  %v78 = vld [vmem:[%s1 + $0x1e8] sm:$0xff]
  %v79 = vld [vmem:[%s1 + $0x1f0] sm:$0xff]
  %v80 = vld [vmem:[%s1 + $0x1f8] sm:$0xff]
  %v81 = vld [vmem:[%s0] sm:$0xff]
  %v82 = vld [vmem:[%s0 + $0x8] sm:$0xff]
  %v83 = vld [vmem:[%s0 + $0x10] sm:$0xff]
  %v84 = vld [vmem:[%s0 + $0x18] sm:$0xff]
  %85 = vmatprep.subr.mxu0 %v18
  %86 = vmatpush1.msra.mxu0 %v17
  %87 = vmatprep.subr.mxu0 %v22
  %88 = vmatpush1.msra.mxu0 %v21
  %89 = vmatprep.subr.mxu0 %v26
  %90 = vmatpush1.msra.mxu0 %v25
  %91 = vmatprep.subr.mxu0 %v30
  %92 = vmatpush1.msra.mxu0 %v29
  %93 = vmatprep.subr.mxu0 %v34
  %94 = vmatpush1.msra.mxu0 %v33
  %95 = vmatprep.subr.mxu0 %v38
  %96 = vmatpush1.msra.mxu0 %v37
  %97 = vmatprep.subr.mxu0 %v42
  %98 = vmatpush1.msra.mxu0 %v41
  %99 = vmatprep.subr.mxu0 %v46
  %100 = vmatpush1.msra.mxu0 %v45
  %101 = vmatprep.subr.mxu0 %v50
  %102 = vmatpush1.msra.mxu0 %v49
  %103 = vmatprep.subr.mxu0 %v54
  %104 = vmatpush1.msra.mxu0 %v53
  %105 = vmatprep.subr.mxu0 %v58
  %106 = vmatpush1.msra.mxu0 %v57
  %107 = vmatprep.subr.mxu0 %v62
  %108 = vmatpush1.msra.mxu0 %v61
  %109 = vmatprep.subr.mxu0 %v66
  %110 = vmatpush1.msra.mxu0 %v65
  %111 = vmatprep.subr.mxu0 %v70
  %112 = vmatpush1.msra.mxu0 %v69
  %113 = vmatprep.subr.mxu0 %v74
  %114 = vmatpush1.msra.mxu0 %v73
  %115 = vmatprep.subr.mxu0 %v78
  %116 = vmatpush1.msra.mxu0 %v77
  %117 = vmatprep.subr.mxu0 0.0
  %118 = vmatpush1.msra.mxu0 0.0
  %119 = vmatprep.subr.mxu0 0.0
  %120 = vmatpush1.msra.mxu0 0.0
  %121 = vmatprep.subr.mxu0 0.0
  %122 = vmatpush1.msra.mxu0 0.0
  %123 = vmatprep.subr.mxu0 0.0
  %124 = vmatpush1.msra.mxu0 0.0
  %125 = vmatprep.subr.mxu0 0.0
  %126 = vmatpush1.msra.mxu0 0.0
  %127 = vmatprep.subr.mxu0 0.0
  %128 = vmatpush1.msra.mxu0 0.0
  %129 = vmatprep.subr.mxu0 0.0
  %130 = vmatpush1.msra.mxu0 0.0
  %131 = vmatprep.subr.mxu0 0.0
  %132 = vmatpush1.msra.mxu0 0.0
  %133 = vmatprep.subr.mxu0 0.0
  %134 = vmatpush1.msra.mxu0 0.0
  %135 = vmatprep.subr.mxu0 0.0
  %136 = vmatpush1.msra.mxu0 0.0
  %137 = vmatprep.subr.mxu0 0.0
  %138 = vmatpush1.msra.mxu0 0.0
  %139 = vmatprep.subr.mxu0 0.0
  %140 = vmatpush1.msra.mxu0 0.0
  %141 = vmatprep.subr.mxu0 0.0
  %142 = vmatpush1.msra.mxu0 0.0
  %143 = vmatprep.subr.mxu0 0.0
  %144 = vmatpush1.msra.mxu0 0.0
  %145 = vmatprep.subr.mxu0 0.0
  %146 = vmatpush1.msra.mxu0 0.0
  %147 = vmatprep.subr.mxu0 0.0
  %148 = vmatpush1.msra.mxu0 0.0
  %149 = vmatprep.mubr.f32.mxu0 0.0
  %150 = vmatmul.mubr.f32.gmra.mrb[0].mxu0 0.0
  %v151 = vpop.f32.mrb[0].mxu0
  %v152 = vadd.f32 0.0, %v151
  %v153 = vpop.f32.mrb[0].mxu0
  %v154 = vadd.f32 0.0, %v153
  %155 = vdwg.mxu0
  %156 = vmatprep.subr.mxu0 %v20
  %157 = vmatpush1.msra.mxu0 %v19
  %158 = vmatprep.subr.mxu0 %v24
  %159 = vmatpush1.msra.mxu0 %v23
  %160 = vmatprep.subr.mxu0 %v28
  %161 = vmatpush1.msra.mxu0 %v27
  %162 = vmatprep.subr.mxu0 %v32
  %163 = vmatpush1.msra.mxu0 %v31
  %164 = vmatprep.subr.mxu0 %v36
  %165 = vmatpush1.msra.mxu0 %v35
  %166 = vmatprep.subr.mxu0 %v40
  %167 = vmatpush1.msra.mxu0 %v39
  %168 = vmatprep.subr.mxu0 %v44
  %169 = vmatpush1.msra.mxu0 %v43
  %170 = vmatprep.subr.mxu0 %v48
  %171 = vmatpush1.msra.mxu0 %v47
  %172 = vmatprep.subr.mxu0 %v52
  %173 = vmatpush1.msra.mxu0 %v51
  %174 = vmatprep.subr.mxu0 %v56
  %175 = vmatpush1.msra.mxu0 %v55
  %176 = vmatprep.subr.mxu0 %v60
  %177 = vmatpush1.msra.mxu0 %v59
  %178 = vmatprep.subr.mxu0 %v64
  %179 = vmatpush1.msra.mxu0 %v63
  %180 = vmatprep.subr.mxu0 %v68
  %181 = vmatpush1.msra.mxu0 %v67
  %182 = vmatprep.subr.mxu0 %v72
  %183 = vmatpush1.msra.mxu0 %v71
  %184 = vmatprep.subr.mxu0 %v76
  %185 = vmatpush1.msra.mxu0 %v75
  %186 = vmatprep.subr.mxu0 %v80
  %187 = vmatpush1.msra.mxu0 %v79
  %188 = vmatprep.subr.mxu0 0.0
  %189 = vmatpush1.msra.mxu0 0.0
  %190 = vmatprep.subr.mxu0 0.0
  %191 = vmatpush1.msra.mxu0 0.0
  %192 = vmatprep.subr.mxu0 0.0
  %193 = vmatpush1.msra.mxu0 0.0
  %194 = vmatprep.subr.mxu0 0.0
  %195 = vmatpush1.msra.mxu0 0.0
  %196 = vmatprep.subr.mxu0 0.0
  %197 = vmatpush1.msra.mxu0 0.0
  %198 = vmatprep.subr.mxu0 0.0
  %199 = vmatpush1.msra.mxu0 0.0
  %200 = vmatprep.subr.mxu0 0.0
  %201 = vmatpush1.msra.mxu0 0.0
  %202 = vmatprep.subr.mxu0 0.0
  %203 = vmatpush1.msra.mxu0 0.0
  %204 = vmatprep.subr.mxu0 0.0
  %205 = vmatpush1.msra.mxu0 0.0
  %206 = vmatprep.subr.mxu0 0.0
  %207 = vmatpush1.msra.mxu0 0.0
  %208 = vmatprep.subr.mxu0 0.0
  %209 = vmatpush1.msra.mxu0 0.0
  %210 = vmatprep.subr.mxu0 0.0
  %211 = vmatpush1.msra.mxu0 0.0
  %212 = vmatprep.subr.mxu0 0.0
  %213 = vmatpush1.msra.mxu0 0.0
  %214 = vmatprep.subr.mxu0 0.0
  %215 = vmatpush1.msra.mxu0 0.0
  %216 = vmatprep.subr.mxu0 0.0
  %217 = vmatpush1.msra.mxu0 0.0
  %218 = vmatprep.subr.mxu0 0.0
  %219 = vmatpush1.msra.mxu0 0.0
  %220 = vmatprep.mubr.f32.mxu0 0.0
  %221 = vmatmul.mubr.f32.gmra.mrb[0].mxu0 0.0
  %v222 = vpop.f32.mrb[0].mxu0
  %v223 = vadd.f32 0.0, %v222
  %v224 = vpop.f32.mrb[0].mxu0
  %v225 = vadd.f32 0.0, %v224
  %226 = vdwg.mxu0
  %v227 = vadd.f32 %v81, %v152
  %v228 = vadd.f32 %v82, %v154
  %v229 = vadd.f32 %v83, %v223
  %v230 = vadd.f32 %v84, %v225
  %v231 = vxor.u32 %v227, 2147483648
  %v232 = vxor.u32 %v228, 2147483648
  %v233 = vxor.u32 %v229, 2147483648
  %v234 = vmul.f32 %v231, 1.442695
  %v235 = vpow.pop %v234
  %v236 = vmul.f32 %v232, 1.442695
  %v237 = vpow.pop %v236
  %v238 = vmul.f32 %v233, 1.442695
  %v239 = vpow.pop %v238
  %v240 = vadd.f32 %v235, 1.0
  %v241 = vadd.f32 %v237, 1.0
  %v242 = vadd.f32 %v239, 1.0
  %v243 = vrcp.pop %v240
  %v244 = vmul.f32 1.0, %v243
  %v245 = vrcp.pop %v241
  %v246 = vmul.f32 1.0, %v245
  %v247 = vrcp.pop %v242
  %v248 = vmul.f32 1.0, %v247
  %v249 = vtanh.pop %v230
  %v250 = vmul.f32 %v246, 0.0
  %v251 = vmul.f32 %v244, %v249
  %v252 = vadd.f32 %v250, %v251
  %v253 = vtanh.pop %v252
  %v254 = vmul.f32 %v248, %v253
  %v255 = vadd.f32 %v254, 0.0
  %s256 = scalar_lea.vmem %s0, 32
  %v257 = vld [vmem:[%s256] sm:$0xff]
  %v258 = vld [vmem:[%s256 + $0x8] sm:$0xff]
  %v259 = vld [vmem:[%s256 + $0x10] sm:$0xff]
  %v260 = vld [vmem:[%s256 + $0x18] sm:$0xff]
  %261 = vmatprep.subr.mxu0 %v18
  %262 = vmatpush1.msra.mxu0 %v17
  %263 = vmatprep.subr.mxu0 %v22
  %264 = vmatpush1.msra.mxu0 %v21
  %265 = vmatprep.subr.mxu0 %v26
  %266 = vmatpush1.msra.mxu0 %v25
  %267 = vmatprep.subr.mxu0 %v30
  %268 = vmatpush1.msra.mxu0 %v29
  %269 = vmatprep.subr.mxu0 %v34
  %270 = vmatpush1.msra.mxu0 %v33
  %271 = vmatprep.subr.mxu0 %v38
  %272 = vmatpush1.msra.mxu0 %v37
  %273 = vmatprep.subr.mxu0 %v42
  %274 = vmatpush1.msra.mxu0 %v41
  %275 = vmatprep.subr.mxu0 %v46
  %276 = vmatpush1.msra.mxu0 %v45
  %277 = vmatprep.subr.mxu0 %v50
  %278 = vmatpush1.msra.mxu0 %v49
  %279 = vmatprep.subr.mxu0 %v54
  %280 = vmatpush1.msra.mxu0 %v53
  %281 = vmatprep.subr.mxu0 %v58
  %282 = vmatpush1.msra.mxu0 %v57
  %283 = vmatprep.subr.mxu0 %v62
  %284 = vmatpush1.msra.mxu0 %v61
  %285 = vmatprep.subr.mxu0 %v66
  %286 = vmatpush1.msra.mxu0 %v65
  %287 = vmatprep.subr.mxu0 %v70
  %288 = vmatpush1.msra.mxu0 %v69
  %289 = vmatprep.subr.mxu0 %v74
  %290 = vmatpush1.msra.mxu0 %v73
  %291 = vmatprep.subr.mxu0 %v78
  %292 = vmatpush1.msra.mxu0 %v77
  %293 = vmatprep.subr.mxu0 0.0
  %294 = vmatpush1.msra.mxu0 0.0
  %295 = vmatprep.subr.mxu0 0.0
  %296 = vmatpush1.msra.mxu0 0.0
  %297 = vmatprep.subr.mxu0 0.0
  %298 = vmatpush1.msra.mxu0 0.0
  %299 = vmatprep.subr.mxu0 0.0
  %300 = vmatpush1.msra.mxu0 0.0
  %301 = vmatprep.subr.mxu0 0.0
  %302 = vmatpush1.msra.mxu0 0.0
  %303 = vmatprep.subr.mxu0 0.0
  %304 = vmatpush1.msra.mxu0 0.0
  %305 = vmatprep.subr.mxu0 0.0
  %306 = vmatpush1.msra.mxu0 0.0
  %307 = vmatprep.subr.mxu0 0.0
  %308 = vmatpush1.msra.mxu0 0.0
  %309 = vmatprep.subr.mxu0 0.0
  %310 = vmatpush1.msra.mxu0 0.0
  %311 = vmatprep.subr.mxu0 0.0
  %312 = vmatpush1.msra.mxu0 0.0
  %313 = vmatprep.subr.mxu0 0.0
  %314 = vmatpush1.msra.mxu0 0.0
  %315 = vmatprep.subr.mxu0 0.0
  %316 = vmatpush1.msra.mxu0 0.0
  %317 = vmatprep.subr.mxu0 0.0
  %318 = vmatpush1.msra.mxu0 0.0
  %319 = vmatprep.subr.mxu0 0.0
  %320 = vmatpush1.msra.mxu0 0.0
  %321 = vmatprep.subr.mxu0 0.0
  %322 = vmatpush1.msra.mxu0 0.0
  %323 = vmatprep.subr.mxu0 0.0
  %324 = vmatpush1.msra.mxu0 0.0
  %325 = vmatprep.mubr.f32.mxu0 0.0
  %326 = vmatmul.mubr.f32.gmra.mrb[0].mxu0 %v254
  %v327 = vpop.f32.mrb[0].mxu0
  %v328 = vadd.f32 0.0, %v327
  %v329 = vpop.f32.mrb[0].mxu0
  %v330 = vadd.f32 0.0, %v329
  %331 = vdwg.mxu0
  %332 = vmatprep.subr.mxu0 %v20
  %333 = vmatpush1.msra.mxu0 %v19
  %334 = vmatprep.subr.mxu0 %v24
  %335 = vmatpush1.msra.mxu0 %v23
  %336 = vmatprep.subr.mxu0 %v28
  %337 = vmatpush1.msra.mxu0 %v27
  %338 = vmatprep.subr.mxu0 %v32
  %339 = vmatpush1.msra.mxu0 %v31
  %340 = vmatprep.subr.mxu0 %v36
  %341 = vmatpush1.msra.mxu0 %v35
  %342 = vmatprep.subr.mxu0 %v40
  %343 = vmatpush1.msra.mxu0 %v39
  %344 = vmatprep.subr.mxu0 %v44
  %345 = vmatpush1.msra.mxu0 %v43
  %346 = vmatprep.subr.mxu0 %v48
  %347 = vmatpush1.msra.mxu0 %v47
  %348 = vmatprep.subr.mxu0 %v52
  %349 = vmatpush1.msra.mxu0 %v51
  %350 = vmatprep.subr.mxu0 %v56
  %351 = vmatpush1.msra.mxu0 %v55
  %352 = vmatprep.subr.mxu0 %v60
  %353 = vmatpush1.msra.mxu0 %v59
  %354 = vmatprep.subr.mxu0 %v64
  %355 = vmatpush1.msra.mxu0 %v63
  %356 = vmatprep.subr.mxu0 %v68
  %357 = vmatpush1.msra.mxu0 %v67
  %358 = vmatprep.subr.mxu0 %v72
  %359 = vmatpush1.msra.mxu0 %v71
  %360 = vmatprep.subr.mxu0 %v76
  %361 = vmatpush1.msra.mxu0 %v75
  %362 = vmatprep.subr.mxu0 %v80
  %363 = vmatpush1.msra.mxu0 %v79
  %364 = vmatprep.subr.mxu0 0.0
  %365 = vmatpush1.msra.mxu0 0.0
  %366 = vmatprep.subr.mxu0 0.0
  %367 = vmatpush1.msra.mxu0 0.0
  %368 = vmatprep.subr.mxu0 0.0
  %369 = vmatpush1.msra.mxu0 0.0
  %370 = vmatprep.subr.mxu0 0.0
  %371 = vmatpush1.msra.mxu0 0.0
  %372 = vmatprep.subr.mxu0 0.0
  %373 = vmatpush1.msra.mxu0 0.0
  %374 = vmatprep.subr.mxu0 0.0
  %375 = vmatpush1.msra.mxu0 0.0
  %376 = vmatprep.subr.mxu0 0.0
  %377 = vmatpush1.msra.mxu0 0.0
  %378 = vmatprep.subr.mxu0 0.0
  %379 = vmatpush1.msra.mxu0 0.0
  %380 = vmatprep.subr.mxu0 0.0
  %381 = vmatpush1.msra.mxu0 0.0
  %382 = vmatprep.subr.mxu0 0.0
  %383 = vmatpush1.msra.mxu0 0.0
  %384 = vmatprep.subr.mxu0 0.0
  %385 = vmatpush1.msra.mxu0 0.0
  %386 = vmatprep.subr.mxu0 0.0
  %387 = vmatpush1.msra.mxu0 0.0
  %388 = vmatprep.subr.mxu0 0.0
  %389 = vmatpush1.msra.mxu0 0.0
  %390 = vmatprep.subr.mxu0 0.0
  %391 = vmatpush1.msra.mxu0 0.0
  %392 = vmatprep.subr.mxu0 0.0
  %393 = vmatpush1.msra.mxu0 0.0
  %394 = vmatprep.subr.mxu0 0.0
  %395 = vmatpush1.msra.mxu0 0.0
  %396 = vmatprep.mubr.f32.mxu0 0.0
  %397 = vmatmul.mubr.f32.gmra.mrb[0].mxu0 %v254
  %v398 = vpop.f32.mrb[0].mxu0
  %v399 = vadd.f32 0.0, %v398
  %v400 = vpop.f32.mrb[0].mxu0
  %v401 = vadd.f32 0.0, %v400
  %402 = vdwg.mxu0
  %v403 = vadd.f32 %v257, %v328
  %v404 = vadd.f32 %v258, %v330
  %v405 = vadd.f32 %v259, %v399
  %v406 = vadd.f32 %v260, %v401
  %v407 = vxor.u32 %v403, 2147483648
  %v408 = vxor.u32 %v404, 2147483648
  %v409 = vxor.u32 %v405, 2147483648
  %v410 = vmul.f32 %v407, 1.442695
  %v411 = vpow.pop %v410
  %v412 = vmul.f32 %v408, 1.442695
  %v413 = vpow.pop %v412
  %v414 = vmul.f32 %v409, 1.442695
  %v415 = vpow.pop %v414
  %v416 = vadd.f32 %v411, 1.0
  %v417 = vadd.f32 %v413, 1.0
  %v418 = vadd.f32 %v415, 1.0
  %v419 = vrcp.pop %v416
  %v420 = vmul.f32 1.0, %v419
  %v421 = vrcp.pop %v417
  %v422 = vmul.f32 1.0, %v421
  %v423 = vrcp.pop %v418
  %v424 = vmul.f32 1.0, %v423
  %v425 = vtanh.pop %v406
  %v426 = vmul.f32 %v422, %v252
  %v427 = vmul.f32 %v420, %v425
  %v428 = vadd.f32 %v426, %v427
  %v429 = vtanh.pop %v428
  %v430 = vmul.f32 %v424, %v429
  %v431 = vadd.f32 %v255, %v430
  %s432 = scalar_lea.vmem %s0, 64
  %v433 = vld [vmem:[%s432] sm:$0xff]
  %v434 = vld [vmem:[%s432 + $0x8] sm:$0xff]
  %v435 = vld [vmem:[%s432 + $0x10] sm:$0xff]
  %v436 = vld [vmem:[%s432 + $0x18] sm:$0xff]
  %437 = vmatprep.subr.mxu0 %v18
  %438 = vmatpush1.msra.mxu0 %v17
  %439 = vmatprep.subr.mxu0 %v22
  %440 = vmatpush1.msra.mxu0 %v21
  %441 = vmatprep.subr.mxu0 %v26
  %442 = vmatpush1.msra.mxu0 %v25
  %443 = vmatprep.subr.mxu0 %v30
  %444 = vmatpush1.msra.mxu0 %v29
  %445 = vmatprep.subr.mxu0 %v34
  %446 = vmatpush1.msra.mxu0 %v33
  %447 = vmatprep.subr.mxu0 %v38
  %448 = vmatpush1.msra.mxu0 %v37
  %449 = vmatprep.subr.mxu0 %v42
  %450 = vmatpush1.msra.mxu0 %v41
  %451 = vmatprep.subr.mxu0 %v46
  %452 = vmatpush1.msra.mxu0 %v45
  %453 = vmatprep.subr.mxu0 %v50
  %454 = vmatpush1.msra.mxu0 %v49
  %455 = vmatprep.subr.mxu0 %v54
  %456 = vmatpush1.msra.mxu0 %v53
  %457 = vmatprep.subr.mxu0 %v58
  %458 = vmatpush1.msra.mxu0 %v57
  %459 = vmatprep.subr.mxu0 %v62
  %460 = vmatpush1.msra.mxu0 %v61
  %461 = vmatprep.subr.mxu0 %v66
  %462 = vmatpush1.msra.mxu0 %v65
  %463 = vmatprep.subr.mxu0 %v70
  %464 = vmatpush1.msra.mxu0 %v69
  %465 = vmatprep.subr.mxu0 %v74
  %466 = vmatpush1.msra.mxu0 %v73
  %467 = vmatprep.subr.mxu0 %v78
  %468 = vmatpush1.msra.mxu0 %v77
  %469 = vmatprep.subr.mxu0 0.0
  %470 = vmatpush1.msra.mxu0 0.0
  %471 = vmatprep.subr.mxu0 0.0
  %472 = vmatpush1.msra.mxu0 0.0
  %473 = vmatprep.subr.mxu0 0.0
  %474 = vmatpush1.msra.mxu0 0.0
  %475 = vmatprep.subr.mxu0 0.0
  %476 = vmatpush1.msra.mxu0 0.0
  %477 = vmatprep.subr.mxu0 0.0
  %478 = vmatpush1.msra.mxu0 0.0
  %479 = vmatprep.subr.mxu0 0.0
  %480 = vmatpush1.msra.mxu0 0.0
  %481 = vmatprep.subr.mxu0 0.0
  %482 = vmatpush1.msra.mxu0 0.0
  %483 = vmatprep.subr.mxu0 0.0
  %484 = vmatpush1.msra.mxu0 0.0
  %485 = vmatprep.subr.mxu0 0.0
  %486 = vmatpush1.msra.mxu0 0.0
  %487 = vmatprep.subr.mxu0 0.0
  %488 = vmatpush1.msra.mxu0 0.0
  %489 = vmatprep.subr.mxu0 0.0
  %490 = vmatpush1.msra.mxu0 0.0
  %491 = vmatprep.subr.mxu0 0.0
  %492 = vmatpush1.msra.mxu0 0.0
  %493 = vmatprep.subr.mxu0 0.0
  %494 = vmatpush1.msra.mxu0 0.0
  %495 = vmatprep.subr.mxu0 0.0
  %496 = vmatpush1.msra.mxu0 0.0
  %497 = vmatprep.subr.mxu0 0.0
  %498 = vmatpush1.msra.mxu0 0.0
  %499 = vmatprep.subr.mxu0 0.0
  %500 = vmatpush1.msra.mxu0 0.0
  %501 = vmatprep.mubr.f32.mxu0 0.0
  %502 = vmatmul.mubr.f32.gmra.mrb[0].mxu0 %v430
  %v503 = vpop.f32.mrb[0].mxu0
  %v504 = vadd.f32 0.0, %v503
  %v505 = vpop.f32.mrb[0].mxu0
  %v506 = vadd.f32 0.0, %v505
  %507 = vdwg.mxu0
  %508 = vmatprep.subr.mxu0 %v20
  %509 = vmatpush1.msra.mxu0 %v19
  %510 = vmatprep.subr.mxu0 %v24
  %511 = vmatpush1.msra.mxu0 %v23
  %512 = vmatprep.subr.mxu0 %v28
  %513 = vmatpush1.msra.mxu0 %v27
  %514 = vmatprep.subr.mxu0 %v32
  %515 = vmatpush1.msra.mxu0 %v31
  %516 = vmatprep.subr.mxu0 %v36
  %517 = vmatpush1.msra.mxu0 %v35
  %518 = vmatprep.subr.mxu0 %v40
  %519 = vmatpush1.msra.mxu0 %v39
  %520 = vmatprep.subr.mxu0 %v44
  %521 = vmatpush1.msra.mxu0 %v43
  %522 = vmatprep.subr.mxu0 %v48
  %523 = vmatpush1.msra.mxu0 %v47
  %524 = vmatprep.subr.mxu0 %v52
  %525 = vmatpush1.msra.mxu0 %v51
  %526 = vmatprep.subr.mxu0 %v56
  %527 = vmatpush1.msra.mxu0 %v55
  %528 = vmatprep.subr.mxu0 %v60
  %529 = vmatpush1.msra.mxu0 %v59
  %530 = vmatprep.subr.mxu0 %v64
  %531 = vmatpush1.msra.mxu0 %v63
  %532 = vmatprep.subr.mxu0 %v68
  %533 = vmatpush1.msra.mxu0 %v67
  %534 = vmatprep.subr.mxu0 %v72
  %535 = vmatpush1.msra.mxu0 %v71
  %536 = vmatprep.subr.mxu0 %v76
  %537 = vmatpush1.msra.mxu0 %v75
  %538 = vmatprep.subr.mxu0 %v80
  %539 = vmatpush1.msra.mxu0 %v79
  %540 = vmatprep.subr.mxu0 0.0
  %541 = vmatpush1.msra.mxu0 0.0
  %542 = vmatprep.subr.mxu0 0.0
  %543 = vmatpush1.msra.mxu0 0.0
  %544 = vmatprep.subr.mxu0 0.0
  %545 = vmatpush1.msra.mxu0 0.0
  %546 = vmatprep.subr.mxu0 0.0
  %547 = vmatpush1.msra.mxu0 0.0
  %548 = vmatprep.subr.mxu0 0.0
  %549 = vmatpush1.msra.mxu0 0.0
  %550 = vmatprep.subr.mxu0 0.0
  %551 = vmatpush1.msra.mxu0 0.0
  %552 = vmatprep.subr.mxu0 0.0
  %553 = vmatpush1.msra.mxu0 0.0
  %554 = vmatprep.subr.mxu0 0.0
  %555 = vmatpush1.msra.mxu0 0.0
  %556 = vmatprep.subr.mxu0 0.0
  %557 = vmatpush1.msra.mxu0 0.0
  %558 = vmatprep.subr.mxu0 0.0
  %559 = vmatpush1.msra.mxu0 0.0
  %560 = vmatprep.subr.mxu0 0.0
  %561 = vmatpush1.msra.mxu0 0.0
  %562 = vmatprep.subr.mxu0 0.0
  %563 = vmatpush1.msra.mxu0 0.0
  %564 = vmatprep.subr.mxu0 0.0
  %565 = vmatpush1.msra.mxu0 0.0
  %566 = vmatprep.subr.mxu0 0.0
  %567 = vmatpush1.msra.mxu0 0.0
  %568 = vmatprep.subr.mxu0 0.0
  %569 = vmatpush1.msra.mxu0 0.0
  %570 = vmatprep.subr.mxu0 0.0
  %571 = vmatpush1.msra.mxu0 0.0
  %572 = vmatprep.mubr.f32.mxu0 0.0
  %573 = vmatmul.mubr.f32.gmra.mrb[0].mxu0 %v430
  %v574 = vpop.f32.mrb[0].mxu0
  %v575 = vadd.f32 0.0, %v574
  %v576 = vpop.f32.mrb[0].mxu0
  %v577 = vadd.f32 0.0, %v576
  %578 = vdwg.mxu0
  %v579 = vadd.f32 %v433, %v504
  %v580 = vadd.f32 %v434, %v506
  %v581 = vadd.f32 %v435, %v575
  %v582 = vadd.f32 %v436, %v577
  %v583 = vxor.u32 %v579, 2147483648
  %v584 = vxor.u32 %v580, 2147483648
  %v585 = vxor.u32 %v581, 2147483648
  %v586 = vmul.f32 %v583, 1.442695
  %v587 = vpow.pop %v586
  %v588 = vmul.f32 %v584, 1.442695
  %v589 = vpow.pop %v588
  %v590 = vmul.f32 %v585, 1.442695
  %v591 = vpow.pop %v590
  %v592 = vadd.f32 %v587, 1.0
  %v593 = vadd.f32 %v589, 1.0
  %v594 = vadd.f32 %v591, 1.0
  %v595 = vrcp.pop %v592
  %v596 = vmul.f32 1.0, %v595
  %v597 = vrcp.pop %v593
  %v598 = vmul.f32 1.0, %v597
  %v599 = vrcp.pop %v594
  %v600 = vmul.f32 1.0, %v599
  %v601 = vtanh.pop %v582
  %v602 = vmul.f32 %v598, %v428
  %v603 = vmul.f32 %v596, %v601
  %v604 = vadd.f32 %v602, %v603
  %v605 = vtanh.pop %v604
  %v606 = vmul.f32 %v600, %v605
  %v607 = vadd.f32 %v431, %v606
  %s608 = scalar_lea.vmem %s0, 96
  %v609 = vld [vmem:[%s608] sm:$0xff]
  %v610 = vld [vmem:[%s608 + $0x8] sm:$0xff]
  %v611 = vld [vmem:[%s608 + $0x10] sm:$0xff]
  %v612 = vld [vmem:[%s608 + $0x18] sm:$0xff]
  %613 = vmatprep.subr.mxu0 %v18
  %614 = vmatpush1.msra.mxu0 %v17
  %615 = vmatprep.subr.mxu0 %v22
  %616 = vmatpush1.msra.mxu0 %v21
  %617 = vmatprep.subr.mxu0 %v26
  %618 = vmatpush1.msra.mxu0 %v25
  %619 = vmatprep.subr.mxu0 %v30
  %620 = vmatpush1.msra.mxu0 %v29
  %621 = vmatprep.subr.mxu0 %v34
  %622 = vmatpush1.msra.mxu0 %v33
  %623 = vmatprep.subr.mxu0 %v38
  %624 = vmatpush1.msra.mxu0 %v37
  %625 = vmatprep.subr.mxu0 %v42
  %626 = vmatpush1.msra.mxu0 %v41
  %627 = vmatprep.subr.mxu0 %v46
  %628 = vmatpush1.msra.mxu0 %v45
  %629 = vmatprep.subr.mxu0 %v50
  %630 = vmatpush1.msra.mxu0 %v49
  %631 = vmatprep.subr.mxu0 %v54
  %632 = vmatpush1.msra.mxu0 %v53
  %633 = vmatprep.subr.mxu0 %v58
  %634 = vmatpush1.msra.mxu0 %v57
  %635 = vmatprep.subr.mxu0 %v62
  %636 = vmatpush1.msra.mxu0 %v61
  %637 = vmatprep.subr.mxu0 %v66
  %638 = vmatpush1.msra.mxu0 %v65
  %639 = vmatprep.subr.mxu0 %v70
  %640 = vmatpush1.msra.mxu0 %v69
  %641 = vmatprep.subr.mxu0 %v74
  %642 = vmatpush1.msra.mxu0 %v73
  %643 = vmatprep.subr.mxu0 %v78
  %644 = vmatpush1.msra.mxu0 %v77
  %645 = vmatprep.subr.mxu0 0.0
  %646 = vmatpush1.msra.mxu0 0.0
  %647 = vmatprep.subr.mxu0 0.0
  %648 = vmatpush1.msra.mxu0 0.0
  %649 = vmatprep.subr.mxu0 0.0
  %650 = vmatpush1.msra.mxu0 0.0
  %651 = vmatprep.subr.mxu0 0.0
  %652 = vmatpush1.msra.mxu0 0.0
  %653 = vmatprep.subr.mxu0 0.0
  %654 = vmatpush1.msra.mxu0 0.0
  %655 = vmatprep.subr.mxu0 0.0
  %656 = vmatpush1.msra.mxu0 0.0
  %657 = vmatprep.subr.mxu0 0.0
  %658 = vmatpush1.msra.mxu0 0.0
  %659 = vmatprep.subr.mxu0 0.0
  %660 = vmatpush1.msra.mxu0 0.0
  %661 = vmatprep.subr.mxu0 0.0
  %662 = vmatpush1.msra.mxu0 0.0
  %663 = vmatprep.subr.mxu0 0.0
  %664 = vmatpush1.msra.mxu0 0.0
  %665 = vmatprep.subr.mxu0 0.0
  %666 = vmatpush1.msra.mxu0 0.0
  %667 = vmatprep.subr.mxu0 0.0
  %668 = vmatpush1.msra.mxu0 0.0
  %669 = vmatprep.subr.mxu0 0.0
  %670 = vmatpush1.msra.mxu0 0.0
  %671 = vmatprep.subr.mxu0 0.0
  %672 = vmatpush1.msra.mxu0 0.0
  %673 = vmatprep.subr.mxu0 0.0
  %674 = vmatpush1.msra.mxu0 0.0
  %675 = vmatprep.subr.mxu0 0.0
  %676 = vmatpush1.msra.mxu0 0.0
  %677 = vmatprep.mubr.f32.mxu0 0.0
  %678 = vmatmul.mubr.f32.gmra.mrb[0].mxu0 %v606
  %v679 = vpop.f32.mrb[0].mxu0
  %v680 = vadd.f32 0.0, %v679
  %v681 = vpop.f32.mrb[0].mxu0
  %v682 = vadd.f32 0.0, %v681
  %683 = vdwg.mxu0
  %684 = vmatprep.subr.mxu0 %v20
  %685 = vmatpush1.msra.mxu0 %v19
  %686 = vmatprep.subr.mxu0 %v24
  %687 = vmatpush1.msra.mxu0 %v23
  %688 = vmatprep.subr.mxu0 %v28
  %689 = vmatpush1.msra.mxu0 %v27
  %690 = vmatprep.subr.mxu0 %v32
  %691 = vmatpush1.msra.mxu0 %v31
  %692 = vmatprep.subr.mxu0 %v36
  %693 = vmatpush1.msra.mxu0 %v35
  %694 = vmatprep.subr.mxu0 %v40
  %695 = vmatpush1.msra.mxu0 %v39
  %696 = vmatprep.subr.mxu0 %v44
  %697 = vmatpush1.msra.mxu0 %v43
  %698 = vmatprep.subr.mxu0 %v48
  %699 = vmatpush1.msra.mxu0 %v47
  %700 = vmatprep.subr.mxu0 %v52
  %701 = vmatpush1.msra.mxu0 %v51
  %702 = vmatprep.subr.mxu0 %v56
  %703 = vmatpush1.msra.mxu0 %v55
  %704 = vmatprep.subr.mxu0 %v60
  %705 = vmatpush1.msra.mxu0 %v59
  %706 = vmatprep.subr.mxu0 %v64
  %707 = vmatpush1.msra.mxu0 %v63
  %708 = vmatprep.subr.mxu0 %v68
  %709 = vmatpush1.msra.mxu0 %v67
  %710 = vmatprep.subr.mxu0 %v72
  %711 = vmatpush1.msra.mxu0 %v71
  %712 = vmatprep.subr.mxu0 %v76
  %713 = vmatpush1.msra.mxu0 %v75
  %714 = vmatprep.subr.mxu0 %v80
  %715 = vmatpush1.msra.mxu0 %v79
  %716 = vmatprep.subr.mxu0 0.0
  %717 = vmatpush1.msra.mxu0 0.0
  %718 = vmatprep.subr.mxu0 0.0
  %719 = vmatpush1.msra.mxu0 0.0
  %720 = vmatprep.subr.mxu0 0.0
  %721 = vmatpush1.msra.mxu0 0.0
  %722 = vmatprep.subr.mxu0 0.0
  %723 = vmatpush1.msra.mxu0 0.0
  %724 = vmatprep.subr.mxu0 0.0
  %725 = vmatpush1.msra.mxu0 0.0
  %726 = vmatprep.subr.mxu0 0.0
  %727 = vmatpush1.msra.mxu0 0.0
  %728 = vmatprep.subr.mxu0 0.0
  %729 = vmatpush1.msra.mxu0 0.0
  %730 = vmatprep.subr.mxu0 0.0
  %731 = vmatpush1.msra.mxu0 0.0
  %732 = vmatprep.subr.mxu0 0.0
  %733 = vmatpush1.msra.mxu0 0.0
  %734 = vmatprep.subr.mxu0 0.0
  %735 = vmatpush1.msra.mxu0 0.0
  %736 = vmatprep.subr.mxu0 0.0
  %737 = vmatpush1.msra.mxu0 0.0
  %738 = vmatprep.subr.mxu0 0.0
  %739 = vmatpush1.msra.mxu0 0.0
  %740 = vmatprep.subr.mxu0 0.0
  %741 = vmatpush1.msra.mxu0 0.0
  %742 = vmatprep.subr.mxu0 0.0
  %743 = vmatpush1.msra.mxu0 0.0
  %744 = vmatprep.subr.mxu0 0.0
  %745 = vmatpush1.msra.mxu0 0.0
  %746 = vmatprep.subr.mxu0 0.0
  %747 = vmatpush1.msra.mxu0 0.0
  %748 = vmatprep.mubr.f32.mxu0 0.0
  %749 = vmatmul.mubr.f32.gmra.mrb[0].mxu0 %v606
  %v750 = vpop.f32.mrb[0].mxu0
  %v751 = vadd.f32 0.0, %v750
  %v752 = vpop.f32.mrb[0].mxu0
  %v753 = vadd.f32 0.0, %v752
  %754 = vdwg.mxu0
  %v755 = vadd.f32 %v609, %v680
  %v756 = vadd.f32 %v610, %v682
  %v757 = vadd.f32 %v611, %v751
  %v758 = vadd.f32 %v612, %v753
  %v759 = vxor.u32 %v755, 2147483648
  %v760 = vxor.u32 %v756, 2147483648
  %v761 = vxor.u32 %v757, 2147483648
  %v762 = vmul.f32 %v759, 1.442695
  %v763 = vpow.pop %v762
  %v764 = vmul.f32 %v760, 1.442695
  %v765 = vpow.pop %v764
  %v766 = vmul.f32 %v761, 1.442695
  %v767 = vpow.pop %v766
  %v768 = vadd.f32 %v763, 1.0
  %v769 = vadd.f32 %v765, 1.0
  %v770 = vadd.f32 %v767, 1.0
  %v771 = vrcp.pop %v768
  %v772 = vmul.f32 1.0, %v771
  %v773 = vrcp.pop %v769
  %v774 = vmul.f32 1.0, %v773
  %v775 = vrcp.pop %v770
  %v776 = vmul.f32 1.0, %v775
  %v777 = vtanh.pop %v758
  %v778 = vmul.f32 %v774, %v604
  %v779 = vmul.f32 %v772, %v777
  %v780 = vadd.f32 %v778, %v779
  %v781 = vtanh.pop %v780
  %v782 = vmul.f32 %v776, %v781
  %v783 = vadd.f32 %v607, %v782
  %s784 = scalar_lea.vmem %s0, 128
  %v785 = vld [vmem:[%s784] sm:$0xff]
  %v786 = vld [vmem:[%s784 + $0x8] sm:$0xff]
  %v787 = vld [vmem:[%s784 + $0x10] sm:$0xff]
  %v788 = vld [vmem:[%s784 + $0x18] sm:$0xff]
  %789 = vmatprep.subr.mxu0 %v18
  %790 = vmatpush1.msra.mxu0 %v17
  %791 = vmatprep.subr.mxu0 %v22
  %792 = vmatpush1.msra.mxu0 %v21
  %793 = vmatprep.subr.mxu0 %v26
  %794 = vmatpush1.msra.mxu0 %v25
  %795 = vmatprep.subr.mxu0 %v30
  %796 = vmatpush1.msra.mxu0 %v29
  %797 = vmatprep.subr.mxu0 %v34
  %798 = vmatpush1.msra.mxu0 %v33
  %799 = vmatprep.subr.mxu0 %v38
  %800 = vmatpush1.msra.mxu0 %v37
  %801 = vmatprep.subr.mxu0 %v42
  %802 = vmatpush1.msra.mxu0 %v41
  %803 = vmatprep.subr.mxu0 %v46
  %804 = vmatpush1.msra.mxu0 %v45
  %805 = vmatprep.subr.mxu0 %v50
  %806 = vmatpush1.msra.mxu0 %v49
  %807 = vmatprep.subr.mxu0 %v54
  %808 = vmatpush1.msra.mxu0 %v53
  %809 = vmatprep.subr.mxu0 %v58
  %810 = vmatpush1.msra.mxu0 %v57
  %811 = vmatprep.subr.mxu0 %v62
  %812 = vmatpush1.msra.mxu0 %v61
  %813 = vmatprep.subr.mxu0 %v66
  %814 = vmatpush1.msra.mxu0 %v65
  %815 = vmatprep.subr.mxu0 %v70
  %816 = vmatpush1.msra.mxu0 %v69
  %817 = vmatprep.subr.mxu0 %v74
  %818 = vmatpush1.msra.mxu0 %v73
  %819 = vmatprep.subr.mxu0 %v78
  %820 = vmatpush1.msra.mxu0 %v77
  %821 = vmatprep.subr.mxu0 0.0
  %822 = vmatpush1.msra.mxu0 0.0
  %823 = vmatprep.subr.mxu0 0.0
  %824 = vmatpush1.msra.mxu0 0.0
  %825 = vmatprep.subr.mxu0 0.0
  %826 = vmatpush1.msra.mxu0 0.0
  %827 = vmatprep.subr.mxu0 0.0
  %828 = vmatpush1.msra.mxu0 0.0
  %829 = vmatprep.subr.mxu0 0.0
  %830 = vmatpush1.msra.mxu0 0.0
  %831 = vmatprep.subr.mxu0 0.0
  %832 = vmatpush1.msra.mxu0 0.0
  %833 = vmatprep.subr.mxu0 0.0
  %834 = vmatpush1.msra.mxu0 0.0
  %835 = vmatprep.subr.mxu0 0.0
  %836 = vmatpush1.msra.mxu0 0.0
  %837 = vmatprep.subr.mxu0 0.0
  %838 = vmatpush1.msra.mxu0 0.0
  %839 = vmatprep.subr.mxu0 0.0
  %840 = vmatpush1.msra.mxu0 0.0
  %841 = vmatprep.subr.mxu0 0.0
  %842 = vmatpush1.msra.mxu0 0.0
  %843 = vmatprep.subr.mxu0 0.0
  %844 = vmatpush1.msra.mxu0 0.0
  %845 = vmatprep.subr.mxu0 0.0
  %846 = vmatpush1.msra.mxu0 0.0
  %847 = vmatprep.subr.mxu0 0.0
  %848 = vmatpush1.msra.mxu0 0.0
  %849 = vmatprep.subr.mxu0 0.0
  %850 = vmatpush1.msra.mxu0 0.0
  %851 = vmatprep.subr.mxu0 0.0
  %852 = vmatpush1.msra.mxu0 0.0
  %853 = vmatprep.mubr.f32.mxu0 0.0
  %854 = vmatmul.mubr.f32.gmra.mrb[0].mxu0 %v782
  %v855 = vpop.f32.mrb[0].mxu0
  %v856 = vadd.f32 0.0, %v855
  %v857 = vpop.f32.mrb[0].mxu0
  %v858 = vadd.f32 0.0, %v857
  %859 = vdwg.mxu0
  %860 = vmatprep.subr.mxu0 %v20
  %861 = vmatpush1.msra.mxu0 %v19
  %862 = vmatprep.subr.mxu0 %v24
  %863 = vmatpush1.msra.mxu0 %v23
  %864 = vmatprep.subr.mxu0 %v28
  %865 = vmatpush1.msra.mxu0 %v27
  %866 = vmatprep.subr.mxu0 %v32
  %867 = vmatpush1.msra.mxu0 %v31
  %868 = vmatprep.subr.mxu0 %v36
  %869 = vmatpush1.msra.mxu0 %v35
  %870 = vmatprep.subr.mxu0 %v40
  %871 = vmatpush1.msra.mxu0 %v39
  %872 = vmatprep.subr.mxu0 %v44
  %873 = vmatpush1.msra.mxu0 %v43
  %874 = vmatprep.subr.mxu0 %v48
  %875 = vmatpush1.msra.mxu0 %v47
  %876 = vmatprep.subr.mxu0 %v52
  %877 = vmatpush1.msra.mxu0 %v51
  %878 = vmatprep.subr.mxu0 %v56
  %879 = vmatpush1.msra.mxu0 %v55
  %880 = vmatprep.subr.mxu0 %v60
  %881 = vmatpush1.msra.mxu0 %v59
  %882 = vmatprep.subr.mxu0 %v64
  %883 = vmatpush1.msra.mxu0 %v63
  %884 = vmatprep.subr.mxu0 %v68
  %885 = vmatpush1.msra.mxu0 %v67
  %886 = vmatprep.subr.mxu0 %v72
  %887 = vmatpush1.msra.mxu0 %v71
  %888 = vmatprep.subr.mxu0 %v76
  %889 = vmatpush1.msra.mxu0 %v75
  %890 = vmatprep.subr.mxu0 %v80
  %891 = vmatpush1.msra.mxu0 %v79
  %892 = vmatprep.subr.mxu0 0.0
  %893 = vmatpush1.msra.mxu0 0.0
  %894 = vmatprep.subr.mxu0 0.0
  %895 = vmatpush1.msra.mxu0 0.0
  %896 = vmatprep.subr.mxu0 0.0
  %897 = vmatpush1.msra.mxu0 0.0
  %898 = vmatprep.subr.mxu0 0.0
  %899 = vmatpush1.msra.mxu0 0.0
  %900 = vmatprep.subr.mxu0 0.0
  %901 = vmatpush1.msra.mxu0 0.0
  %902 = vmatprep.subr.mxu0 0.0
  %903 = vmatpush1.msra.mxu0 0.0
  %904 = vmatprep.subr.mxu0 0.0
  %905 = vmatpush1.msra.mxu0 0.0
  %906 = vmatprep.subr.mxu0 0.0
  %907 = vmatpush1.msra.mxu0 0.0
  %908 = vmatprep.subr.mxu0 0.0
  %909 = vmatpush1.msra.mxu0 0.0
  %910 = vmatprep.subr.mxu0 0.0
  %911 = vmatpush1.msra.mxu0 0.0
  %912 = vmatprep.subr.mxu0 0.0
  %913 = vmatpush1.msra.mxu0 0.0
  %914 = vmatprep.subr.mxu0 0.0
  %915 = vmatpush1.msra.mxu0 0.0
  %916 = vmatprep.subr.mxu0 0.0
  %917 = vmatpush1.msra.mxu0 0.0
  %918 = vmatprep.subr.mxu0 0.0
  %919 = vmatpush1.msra.mxu0 0.0
  %920 = vmatprep.subr.mxu0 0.0
  %921 = vmatpush1.msra.mxu0 0.0
  %922 = vmatprep.subr.mxu0 0.0
  %923 = vmatpush1.msra.mxu0 0.0
  %924 = vmatprep.mubr.f32.mxu0 0.0
  %925 = vmatmul.mubr.f32.gmra.mrb[0].mxu0 %v782
  %v926 = vpop.f32.mrb[0].mxu0
  %v927 = vadd.f32 0.0, %v926
  %v928 = vpop.f32.mrb[0].mxu0
  %v929 = vadd.f32 0.0, %v928
  %930 = vdwg.mxu0
  %v931 = vadd.f32 %v785, %v856
  %v932 = vadd.f32 %v786, %v858
  %v933 = vadd.f32 %v787, %v927
  %v934 = vadd.f32 %v788, %v929
  %v935 = vxor.u32 %v931, 2147483648
  %v936 = vxor.u32 %v932, 2147483648
  %v937 = vxor.u32 %v933, 2147483648
  %v938 = vmul.f32 %v935, 1.442695
  %v939 = vpow.pop %v938
  %v940 = vmul.f32 %v936, 1.442695
  %v941 = vpow.pop %v940
  %v942 = vmul.f32 %v937, 1.442695
  %v943 = vpow.pop %v942
  %v944 = vadd.f32 %v939, 1.0
  %v945 = vadd.f32 %v941, 1.0
  %v946 = vadd.f32 %v943, 1.0
  %v947 = vrcp.pop %v944
  %v948 = vmul.f32 1.0, %v947
  %v949 = vrcp.pop %v945
  %v950 = vmul.f32 1.0, %v949
  %v951 = vrcp.pop %v946
  %v952 = vmul.f32 1.0, %v951
  %v953 = vtanh.pop %v934
  %v954 = vmul.f32 %v950, %v780
  %v955 = vmul.f32 %v948, %v953
  %v956 = vadd.f32 %v954, %v955
  %v957 = vtanh.pop %v956
  %v958 = vmul.f32 %v952, %v957
  %v959 = vadd.f32 %v783, %v958
  %s960 = scalar_lea.vmem %s0, 160
  %v961 = vld [vmem:[%s960] sm:$0xff]
  %v962 = vld [vmem:[%s960 + $0x8] sm:$0xff]
  %v963 = vld [vmem:[%s960 + $0x10] sm:$0xff]
  %v964 = vld [vmem:[%s960 + $0x18] sm:$0xff]
  %965 = vmatprep.subr.mxu0 %v18
  %966 = vmatpush1.msra.mxu0 %v17
  %967 = vmatprep.subr.mxu0 %v22
  %968 = vmatpush1.msra.mxu0 %v21
  %969 = vmatprep.subr.mxu0 %v26
  %970 = vmatpush1.msra.mxu0 %v25
  %971 = vmatprep.subr.mxu0 %v30
  %972 = vmatpush1.msra.mxu0 %v29
  %973 = vmatprep.subr.mxu0 %v34
  %974 = vmatpush1.msra.mxu0 %v33
  %975 = vmatprep.subr.mxu0 %v38
  %976 = vmatpush1.msra.mxu0 %v37
  %977 = vmatprep.subr.mxu0 %v42
  %978 = vmatpush1.msra.mxu0 %v41
  %979 = vmatprep.subr.mxu0 %v46
  %980 = vmatpush1.msra.mxu0 %v45
  %981 = vmatprep.subr.mxu0 %v50
  %982 = vmatpush1.msra.mxu0 %v49
  %983 = vmatprep.subr.mxu0 %v54
  %984 = vmatpush1.msra.mxu0 %v53
  %985 = vmatprep.subr.mxu0 %v58
  %986 = vmatpush1.msra.mxu0 %v57
  %987 = vmatprep.subr.mxu0 %v62
  %988 = vmatpush1.msra.mxu0 %v61
  %989 = vmatprep.subr.mxu0 %v66
  %990 = vmatpush1.msra.mxu0 %v65
  %991 = vmatprep.subr.mxu0 %v70
  %992 = vmatpush1.msra.mxu0 %v69
  %993 = vmatprep.subr.mxu0 %v74
  %994 = vmatpush1.msra.mxu0 %v73
  %995 = vmatprep.subr.mxu0 %v78
  %996 = vmatpush1.msra.mxu0 %v77
  %997 = vmatprep.subr.mxu0 0.0
  %998 = vmatpush1.msra.mxu0 0.0
  %999 = vmatprep.subr.mxu0 0.0
  %1000 = vmatpush1.msra.mxu0 0.0
  %1001 = vmatprep.subr.mxu0 0.0
  %1002 = vmatpush1.msra.mxu0 0.0
  %1003 = vmatprep.subr.mxu0 0.0
  %1004 = vmatpush1.msra.mxu0 0.0
  %1005 = vmatprep.subr.mxu0 0.0
  %1006 = vmatpush1.msra.mxu0 0.0
  %1007 = vmatprep.subr.mxu0 0.0
  %1008 = vmatpush1.msra.mxu0 0.0
  %1009 = vmatprep.subr.mxu0 0.0
  %1010 = vmatpush1.msra.mxu0 0.0
  %1011 = vmatprep.subr.mxu0 0.0
  %1012 = vmatpush1.msra.mxu0 0.0
  %1013 = vmatprep.subr.mxu0 0.0
  %1014 = vmatpush1.msra.mxu0 0.0
  %1015 = vmatprep.subr.mxu0 0.0
  %1016 = vmatpush1.msra.mxu0 0.0
  %1017 = vmatprep.subr.mxu0 0.0
  %1018 = vmatpush1.msra.mxu0 0.0
  %1019 = vmatprep.subr.mxu0 0.0
  %1020 = vmatpush1.msra.mxu0 0.0
  %1021 = vmatprep.subr.mxu0 0.0
  %1022 = vmatpush1.msra.mxu0 0.0
  %1023 = vmatprep.subr.mxu0 0.0
  %1024 = vmatpush1.msra.mxu0 0.0
  %1025 = vmatprep.subr.mxu0 0.0
  %1026 = vmatpush1.msra.mxu0 0.0
  %1027 = vmatprep.subr.mxu0 0.0
  %1028 = vmatpush1.msra.mxu0 0.0
  %1029 = vmatprep.mubr.f32.mxu0 0.0
  %1030 = vmatmul.mubr.f32.gmra.mrb[0].mxu0 %v958
  %v1031 = vpop.f32.mrb[0].mxu0
  %v1032 = vadd.f32 0.0, %v1031
  %v1033 = vpop.f32.mrb[0].mxu0
  %v1034 = vadd.f32 0.0, %v1033
  %1035 = vdwg.mxu0
  %1036 = vmatprep.subr.mxu0 %v20
  %1037 = vmatpush1.msra.mxu0 %v19
  %1038 = vmatprep.subr.mxu0 %v24
  %1039 = vmatpush1.msra.mxu0 %v23
  %1040 = vmatprep.subr.mxu0 %v28
  %1041 = vmatpush1.msra.mxu0 %v27
  %1042 = vmatprep.subr.mxu0 %v32
  %1043 = vmatpush1.msra.mxu0 %v31
  %1044 = vmatprep.subr.mxu0 %v36
  %1045 = vmatpush1.msra.mxu0 %v35
  %1046 = vmatprep.subr.mxu0 %v40
  %1047 = vmatpush1.msra.mxu0 %v39
  %1048 = vmatprep.subr.mxu0 %v44
  %1049 = vmatpush1.msra.mxu0 %v43
  %1050 = vmatprep.subr.mxu0 %v48
  %1051 = vmatpush1.msra.mxu0 %v47
  %1052 = vmatprep.subr.mxu0 %v52
  %1053 = vmatpush1.msra.mxu0 %v51
  %1054 = vmatprep.subr.mxu0 %v56
  %1055 = vmatpush1.msra.mxu0 %v55
  %1056 = vmatprep.subr.mxu0 %v60
  %1057 = vmatpush1.msra.mxu0 %v59
  %1058 = vmatprep.subr.mxu0 %v64
  %1059 = vmatpush1.msra.mxu0 %v63
  %1060 = vmatprep.subr.mxu0 %v68
  %1061 = vmatpush1.msra.mxu0 %v67
  %1062 = vmatprep.subr.mxu0 %v72
  %1063 = vmatpush1.msra.mxu0 %v71
  %1064 = vmatprep.subr.mxu0 %v76
  %1065 = vmatpush1.msra.mxu0 %v75
  %1066 = vmatprep.subr.mxu0 %v80
  %1067 = vmatpush1.msra.mxu0 %v79
  %1068 = vmatprep.subr.mxu0 0.0
  %1069 = vmatpush1.msra.mxu0 0.0
  %1070 = vmatprep.subr.mxu0 0.0
  %1071 = vmatpush1.msra.mxu0 0.0
  %1072 = vmatprep.subr.mxu0 0.0
  %1073 = vmatpush1.msra.mxu0 0.0
  %1074 = vmatprep.subr.mxu0 0.0
  %1075 = vmatpush1.msra.mxu0 0.0
  %1076 = vmatprep.subr.mxu0 0.0
  %1077 = vmatpush1.msra.mxu0 0.0
  %1078 = vmatprep.subr.mxu0 0.0
  %1079 = vmatpush1.msra.mxu0 0.0
  %1080 = vmatprep.subr.mxu0 0.0
  %1081 = vmatpush1.msra.mxu0 0.0
  %1082 = vmatprep.subr.mxu0 0.0
  %1083 = vmatpush1.msra.mxu0 0.0
  %1084 = vmatprep.subr.mxu0 0.0
  %1085 = vmatpush1.msra.mxu0 0.0
  %1086 = vmatprep.subr.mxu0 0.0
  %1087 = vmatpush1.msra.mxu0 0.0
  %1088 = vmatprep.subr.mxu0 0.0
  %1089 = vmatpush1.msra.mxu0 0.0
  %1090 = vmatprep.subr.mxu0 0.0
  %1091 = vmatpush1.msra.mxu0 0.0
  %1092 = vmatprep.subr.mxu0 0.0
  %1093 = vmatpush1.msra.mxu0 0.0
  %1094 = vmatprep.subr.mxu0 0.0
  %1095 = vmatpush1.msra.mxu0 0.0
  %1096 = vmatprep.subr.mxu0 0.0
  %1097 = vmatpush1.msra.mxu0 0.0
  %1098 = vmatprep.subr.mxu0 0.0
  %1099 = vmatpush1.msra.mxu0 0.0
  %1100 = vmatprep.mubr.f32.mxu0 0.0
  %1101 = vmatmul.mubr.f32.gmra.mrb[0].mxu0 %v958
  %v1102 = vpop.f32.mrb[0].mxu0
  %v1103 = vadd.f32 0.0, %v1102
  %v1104 = vpop.f32.mrb[0].mxu0
  %v1105 = vadd.f32 0.0, %v1104
  %1106 = vdwg.mxu0
  %v1107 = vadd.f32 %v961, %v1032
  %v1108 = vadd.f32 %v962, %v1034
  %v1109 = vadd.f32 %v963, %v1103
  %v1110 = vadd.f32 %v964, %v1105
  %v1111 = vxor.u32 %v1107, 2147483648
  %v1112 = vxor.u32 %v1108, 2147483648
  %v1113 = vxor.u32 %v1109, 2147483648
  %v1114 = vmul.f32 %v1111, 1.442695
  %v1115 = vpow.pop %v1114
  %v1116 = vmul.f32 %v1112, 1.442695
  %v1117 = vpow.pop %v1116
  %v1118 = vmul.f32 %v1113, 1.442695
  %v1119 = vpow.pop %v1118
  %v1120 = vadd.f32 %v1115, 1.0
  %v1121 = vadd.f32 %v1117, 1.0
  %v1122 = vadd.f32 %v1119, 1.0
  %v1123 = vrcp.pop %v1120
  %v1124 = vmul.f32 1.0, %v1123
  %v1125 = vrcp.pop %v1121
  %v1126 = vmul.f32 1.0, %v1125
  %v1127 = vrcp.pop %v1122
  %v1128 = vmul.f32 1.0, %v1127
  %v1129 = vtanh.pop %v1110
  %v1130 = vmul.f32 %v1126, %v956
  %v1131 = vmul.f32 %v1124, %v1129
  %v1132 = vadd.f32 %v1130, %v1131
  %v1133 = vtanh.pop %v1132
  %v1134 = vmul.f32 %v1128, %v1133
  %v1135 = vadd.f32 %v959, %v1134
  %s1136 = scalar_lea.vmem %s0, 192
  %v1137 = vld [vmem:[%s1136] sm:$0xff]
  %v1138 = vld [vmem:[%s1136 + $0x8] sm:$0xff]
  %v1139 = vld [vmem:[%s1136 + $0x10] sm:$0xff]
  %v1140 = vld [vmem:[%s1136 + $0x18] sm:$0xff]
  %1141 = vmatprep.subr.mxu0 %v18
  %1142 = vmatpush1.msra.mxu0 %v17
  %1143 = vmatprep.subr.mxu0 %v22
  %1144 = vmatpush1.msra.mxu0 %v21
  %1145 = vmatprep.subr.mxu0 %v26
  %1146 = vmatpush1.msra.mxu0 %v25
  %1147 = vmatprep.subr.mxu0 %v30
  %1148 = vmatpush1.msra.mxu0 %v29
  %1149 = vmatprep.subr.mxu0 %v34
  %1150 = vmatpush1.msra.mxu0 %v33
  %1151 = vmatprep.subr.mxu0 %v38
  %1152 = vmatpush1.msra.mxu0 %v37
  %1153 = vmatprep.subr.mxu0 %v42
  %1154 = vmatpush1.msra.mxu0 %v41
  %1155 = vmatprep.subr.mxu0 %v46
  %1156 = vmatpush1.msra.mxu0 %v45
  %1157 = vmatprep.subr.mxu0 %v50
  %1158 = vmatpush1.msra.mxu0 %v49
  %1159 = vmatprep.subr.mxu0 %v54
  %1160 = vmatpush1.msra.mxu0 %v53
  %1161 = vmatprep.subr.mxu0 %v58
  %1162 = vmatpush1.msra.mxu0 %v57
  %1163 = vmatprep.subr.mxu0 %v62
  %1164 = vmatpush1.msra.mxu0 %v61
  %1165 = vmatprep.subr.mxu0 %v66
  %1166 = vmatpush1.msra.mxu0 %v65
  %1167 = vmatprep.subr.mxu0 %v70
  %1168 = vmatpush1.msra.mxu0 %v69
  %1169 = vmatprep.subr.mxu0 %v74
  %1170 = vmatpush1.msra.mxu0 %v73
  %1171 = vmatprep.subr.mxu0 %v78
  %1172 = vmatpush1.msra.mxu0 %v77
  %1173 = vmatprep.subr.mxu0 0.0
  %1174 = vmatpush1.msra.mxu0 0.0
  %1175 = vmatprep.subr.mxu0 0.0
  %1176 = vmatpush1.msra.mxu0 0.0
  %1177 = vmatprep.subr.mxu0 0.0
  %1178 = vmatpush1.msra.mxu0 0.0
  %1179 = vmatprep.subr.mxu0 0.0
  %1180 = vmatpush1.msra.mxu0 0.0
  %1181 = vmatprep.subr.mxu0 0.0
  %1182 = vmatpush1.msra.mxu0 0.0
  %1183 = vmatprep.subr.mxu0 0.0
  %1184 = vmatpush1.msra.mxu0 0.0
  %1185 = vmatprep.subr.mxu0 0.0
  %1186 = vmatpush1.msra.mxu0 0.0
  %1187 = vmatprep.subr.mxu0 0.0
  %1188 = vmatpush1.msra.mxu0 0.0
  %1189 = vmatprep.subr.mxu0 0.0
  %1190 = vmatpush1.msra.mxu0 0.0
  %1191 = vmatprep.subr.mxu0 0.0
  %1192 = vmatpush1.msra.mxu0 0.0
  %1193 = vmatprep.subr.mxu0 0.0
  %1194 = vmatpush1.msra.mxu0 0.0
  %1195 = vmatprep.subr.mxu0 0.0
  %1196 = vmatpush1.msra.mxu0 0.0
  %1197 = vmatprep.subr.mxu0 0.0
  %1198 = vmatpush1.msra.mxu0 0.0
  %1199 = vmatprep.subr.mxu0 0.0
  %1200 = vmatpush1.msra.mxu0 0.0
  %1201 = vmatprep.subr.mxu0 0.0
  %1202 = vmatpush1.msra.mxu0 0.0
  %1203 = vmatprep.subr.mxu0 0.0
  %1204 = vmatpush1.msra.mxu0 0.0
  %1205 = vmatprep.mubr.f32.mxu0 0.0
  %1206 = vmatmul.mubr.f32.gmra.mrb[0].mxu0 %v1134
  %v1207 = vpop.f32.mrb[0].mxu0
  %v1208 = vadd.f32 0.0, %v1207
  %v1209 = vpop.f32.mrb[0].mxu0
  %v1210 = vadd.f32 0.0, %v1209
  %1211 = vdwg.mxu0
  %1212 = vmatprep.subr.mxu0 %v20
  %1213 = vmatpush1.msra.mxu0 %v19
  %1214 = vmatprep.subr.mxu0 %v24
  %1215 = vmatpush1.msra.mxu0 %v23
  %1216 = vmatprep.subr.mxu0 %v28
  %1217 = vmatpush1.msra.mxu0 %v27
  %1218 = vmatprep.subr.mxu0 %v32
  %1219 = vmatpush1.msra.mxu0 %v31
  %1220 = vmatprep.subr.mxu0 %v36
  %1221 = vmatpush1.msra.mxu0 %v35
  %1222 = vmatprep.subr.mxu0 %v40
  %1223 = vmatpush1.msra.mxu0 %v39
  %1224 = vmatprep.subr.mxu0 %v44
  %1225 = vmatpush1.msra.mxu0 %v43
  %1226 = vmatprep.subr.mxu0 %v48
  %1227 = vmatpush1.msra.mxu0 %v47
  %1228 = vmatprep.subr.mxu0 %v52
  %1229 = vmatpush1.msra.mxu0 %v51
  %1230 = vmatprep.subr.mxu0 %v56
  %1231 = vmatpush1.msra.mxu0 %v55
  %1232 = vmatprep.subr.mxu0 %v60
  %1233 = vmatpush1.msra.mxu0 %v59
  %1234 = vmatprep.subr.mxu0 %v64
  %1235 = vmatpush1.msra.mxu0 %v63
  %1236 = vmatprep.subr.mxu0 %v68
  %1237 = vmatpush1.msra.mxu0 %v67
  %1238 = vmatprep.subr.mxu0 %v72
  %1239 = vmatpush1.msra.mxu0 %v71
  %1240 = vmatprep.subr.mxu0 %v76
  %1241 = vmatpush1.msra.mxu0 %v75
  %1242 = vmatprep.subr.mxu0 %v80
  %1243 = vmatpush1.msra.mxu0 %v79
  %1244 = vmatprep.subr.mxu0 0.0
  %1245 = vmatpush1.msra.mxu0 0.0
  %1246 = vmatprep.subr.mxu0 0.0
  %1247 = vmatpush1.msra.mxu0 0.0
  %1248 = vmatprep.subr.mxu0 0.0
  %1249 = vmatpush1.msra.mxu0 0.0
  %1250 = vmatprep.subr.mxu0 0.0
  %1251 = vmatpush1.msra.mxu0 0.0
  %1252 = vmatprep.subr.mxu0 0.0
  %1253 = vmatpush1.msra.mxu0 0.0
  %1254 = vmatprep.subr.mxu0 0.0
  %1255 = vmatpush1.msra.mxu0 0.0
  %1256 = vmatprep.subr.mxu0 0.0
  %1257 = vmatpush1.msra.mxu0 0.0
  %1258 = vmatprep.subr.mxu0 0.0
  %1259 = vmatpush1.msra.mxu0 0.0
  %1260 = vmatprep.subr.mxu0 0.0
  %1261 = vmatpush1.msra.mxu0 0.0
  %1262 = vmatprep.subr.mxu0 0.0
  %1263 = vmatpush1.msra.mxu0 0.0
  %1264 = vmatprep.subr.mxu0 0.0
  %1265 = vmatpush1.msra.mxu0 0.0
  %1266 = vmatprep.subr.mxu0 0.0
  %1267 = vmatpush1.msra.mxu0 0.0
  %1268 = vmatprep.subr.mxu0 0.0
  %1269 = vmatpush1.msra.mxu0 0.0
  %1270 = vmatprep.subr.mxu0 0.0
  %1271 = vmatpush1.msra.mxu0 0.0
  %1272 = vmatprep.subr.mxu0 0.0
  %1273 = vmatpush1.msra.mxu0 0.0
  %1274 = vmatprep.subr.mxu0 0.0
  %1275 = vmatpush1.msra.mxu0 0.0
  %1276 = vmatprep.mubr.f32.mxu0 0.0
  %1277 = vmatmul.mubr.f32.gmra.mrb[0].mxu0 %v1134
  %v1278 = vpop.f32.mrb[0].mxu0
  %v1279 = vadd.f32 0.0, %v1278
  %v1280 = vpop.f32.mrb[0].mxu0
  %v1281 = vadd.f32 0.0, %v1280
  %1282 = vdwg.mxu0
  %v1283 = vadd.f32 %v1137, %v1208
  %v1284 = vadd.f32 %v1138, %v1210
  %v1285 = vadd.f32 %v1139, %v1279
  %v1286 = vadd.f32 %v1140, %v1281
  %v1287 = vxor.u32 %v1283, 2147483648
  %v1288 = vxor.u32 %v1284, 2147483648
  %v1289 = vxor.u32 %v1285, 2147483648
  %v1290 = vmul.f32 %v1287, 1.442695
  %v1291 = vpow.pop %v1290
  %v1292 = vmul.f32 %v1288, 1.442695
  %v1293 = vpow.pop %v1292
  %v1294 = vmul.f32 %v1289, 1.442695
  %v1295 = vpow.pop %v1294
  %v1296 = vadd.f32 %v1291, 1.0
  %v1297 = vadd.f32 %v1293, 1.0
  %v1298 = vadd.f32 %v1295, 1.0
  %v1299 = vrcp.pop %v1296
  %v1300 = vmul.f32 1.0, %v1299
  %v1301 = vrcp.pop %v1297
  %v1302 = vmul.f32 1.0, %v1301
  %v1303 = vrcp.pop %v1298
  %v1304 = vmul.f32 1.0, %v1303
  %v1305 = vtanh.pop %v1286
  %v1306 = vmul.f32 %v1302, %v1132
  %v1307 = vmul.f32 %v1300, %v1305
  %v1308 = vadd.f32 %v1306, %v1307
  %v1309 = vtanh.pop %v1308
  %v1310 = vmul.f32 %v1304, %v1309
  %v1311 = vadd.f32 %v1135, %v1310
  %s1312 = scalar_lea.vmem %s0, 224
  %v1313 = vld [vmem:[%s1312] sm:$0xff]
  %v1314 = vld [vmem:[%s1312 + $0x8] sm:$0xff]
  %v1315 = vld [vmem:[%s1312 + $0x10] sm:$0xff]
  %v1316 = vld [vmem:[%s1312 + $0x18] sm:$0xff]
  %1317 = vmatprep.subr.mxu0 %v18
  %1318 = vmatpush1.msra.mxu0 %v17
  %1319 = vmatprep.subr.mxu0 %v22
  %1320 = vmatpush1.msra.mxu0 %v21
  %1321 = vmatprep.subr.mxu0 %v26
  %1322 = vmatpush1.msra.mxu0 %v25
  %1323 = vmatprep.subr.mxu0 %v30
  %1324 = vmatpush1.msra.mxu0 %v29
  %1325 = vmatprep.subr.mxu0 %v34
  %1326 = vmatpush1.msra.mxu0 %v33
  %1327 = vmatprep.subr.mxu0 %v38
  %1328 = vmatpush1.msra.mxu0 %v37
  %1329 = vmatprep.subr.mxu0 %v42
  %1330 = vmatpush1.msra.mxu0 %v41
  %1331 = vmatprep.subr.mxu0 %v46
  %1332 = vmatpush1.msra.mxu0 %v45
  %1333 = vmatprep.subr.mxu0 %v50
  %1334 = vmatpush1.msra.mxu0 %v49
  %1335 = vmatprep.subr.mxu0 %v54
  %1336 = vmatpush1.msra.mxu0 %v53
  %1337 = vmatprep.subr.mxu0 %v58
  %1338 = vmatpush1.msra.mxu0 %v57
  %1339 = vmatprep.subr.mxu0 %v62
  %1340 = vmatpush1.msra.mxu0 %v61
  %1341 = vmatprep.subr.mxu0 %v66
  %1342 = vmatpush1.msra.mxu0 %v65
  %1343 = vmatprep.subr.mxu0 %v70
  %1344 = vmatpush1.msra.mxu0 %v69
  %1345 = vmatprep.subr.mxu0 %v74
  %1346 = vmatpush1.msra.mxu0 %v73
  %1347 = vmatprep.subr.mxu0 %v78
  %1348 = vmatpush1.msra.mxu0 %v77
  %1349 = vmatprep.subr.mxu0 0.0
  %1350 = vmatpush1.msra.mxu0 0.0
  %1351 = vmatprep.subr.mxu0 0.0
  %1352 = vmatpush1.msra.mxu0 0.0
  %1353 = vmatprep.subr.mxu0 0.0
  %1354 = vmatpush1.msra.mxu0 0.0
  %1355 = vmatprep.subr.mxu0 0.0
  %1356 = vmatpush1.msra.mxu0 0.0
  %1357 = vmatprep.subr.mxu0 0.0
  %1358 = vmatpush1.msra.mxu0 0.0
  %1359 = vmatprep.subr.mxu0 0.0
  %1360 = vmatpush1.msra.mxu0 0.0
  %1361 = vmatprep.subr.mxu0 0.0
  %1362 = vmatpush1.msra.mxu0 0.0
  %1363 = vmatprep.subr.mxu0 0.0
  %1364 = vmatpush1.msra.mxu0 0.0
  %1365 = vmatprep.subr.mxu0 0.0
  %1366 = vmatpush1.msra.mxu0 0.0
  %1367 = vmatprep.subr.mxu0 0.0
  %1368 = vmatpush1.msra.mxu0 0.0
  %1369 = vmatprep.subr.mxu0 0.0
  %1370 = vmatpush1.msra.mxu0 0.0
  %1371 = vmatprep.subr.mxu0 0.0
  %1372 = vmatpush1.msra.mxu0 0.0
  %1373 = vmatprep.subr.mxu0 0.0
  %1374 = vmatpush1.msra.mxu0 0.0
  %1375 = vmatprep.subr.mxu0 0.0
  %1376 = vmatpush1.msra.mxu0 0.0
  %1377 = vmatprep.subr.mxu0 0.0
  %1378 = vmatpush1.msra.mxu0 0.0
  %1379 = vmatprep.subr.mxu0 0.0
  %1380 = vmatpush1.msra.mxu0 0.0
  %1381 = vmatprep.mubr.f32.mxu0 0.0
  %1382 = vmatmul.mubr.f32.gmra.mrb[0].mxu0 %v1310
  %v1383 = vpop.f32.mrb[0].mxu0
  %v1384 = vadd.f32 0.0, %v1383
  %v1385 = vpop.f32.mrb[0].mxu0
  %v1386 = vadd.f32 0.0, %v1385
  %1387 = vdwg.mxu0
  %1388 = vmatprep.subr.mxu0 %v20
  %1389 = vmatpush1.msra.mxu0 %v19
  %1390 = vmatprep.subr.mxu0 %v24
  %1391 = vmatpush1.msra.mxu0 %v23
  %1392 = vmatprep.subr.mxu0 %v28
  %1393 = vmatpush1.msra.mxu0 %v27
  %1394 = vmatprep.subr.mxu0 %v32
  %1395 = vmatpush1.msra.mxu0 %v31
  %1396 = vmatprep.subr.mxu0 %v36
  %1397 = vmatpush1.msra.mxu0 %v35
  %1398 = vmatprep.subr.mxu0 %v40
  %1399 = vmatpush1.msra.mxu0 %v39
  %1400 = vmatprep.subr.mxu0 %v44
  %1401 = vmatpush1.msra.mxu0 %v43
  %1402 = vmatprep.subr.mxu0 %v48
  %1403 = vmatpush1.msra.mxu0 %v47
  %1404 = vmatprep.subr.mxu0 %v52
  %1405 = vmatpush1.msra.mxu0 %v51
  %1406 = vmatprep.subr.mxu0 %v56
  %1407 = vmatpush1.msra.mxu0 %v55
  %1408 = vmatprep.subr.mxu0 %v60
  %1409 = vmatpush1.msra.mxu0 %v59
  %1410 = vmatprep.subr.mxu0 %v64
  %1411 = vmatpush1.msra.mxu0 %v63
  %1412 = vmatprep.subr.mxu0 %v68
  %1413 = vmatpush1.msra.mxu0 %v67
  %1414 = vmatprep.subr.mxu0 %v72
  %1415 = vmatpush1.msra.mxu0 %v71
  %1416 = vmatprep.subr.mxu0 %v76
  %1417 = vmatpush1.msra.mxu0 %v75
  %1418 = vmatprep.subr.mxu0 %v80
  %1419 = vmatpush1.msra.mxu0 %v79
  %1420 = vmatprep.subr.mxu0 0.0
  %1421 = vmatpush1.msra.mxu0 0.0
  %1422 = vmatprep.subr.mxu0 0.0
  %1423 = vmatpush1.msra.mxu0 0.0
  %1424 = vmatprep.subr.mxu0 0.0
  %1425 = vmatpush1.msra.mxu0 0.0
  %1426 = vmatprep.subr.mxu0 0.0
  %1427 = vmatpush1.msra.mxu0 0.0
  %1428 = vmatprep.subr.mxu0 0.0
  %1429 = vmatpush1.msra.mxu0 0.0
  %1430 = vmatprep.subr.mxu0 0.0
  %1431 = vmatpush1.msra.mxu0 0.0
  %1432 = vmatprep.subr.mxu0 0.0
  %1433 = vmatpush1.msra.mxu0 0.0
  %1434 = vmatprep.subr.mxu0 0.0
  %1435 = vmatpush1.msra.mxu0 0.0
  %1436 = vmatprep.subr.mxu0 0.0
  %1437 = vmatpush1.msra.mxu0 0.0
  %1438 = vmatprep.subr.mxu0 0.0
  %1439 = vmatpush1.msra.mxu0 0.0
  %1440 = vmatprep.subr.mxu0 0.0
  %1441 = vmatpush1.msra.mxu0 0.0
  %1442 = vmatprep.subr.mxu0 0.0
  %1443 = vmatpush1.msra.mxu0 0.0
  %1444 = vmatprep.subr.mxu0 0.0
  %1445 = vmatpush1.msra.mxu0 0.0
  %1446 = vmatprep.subr.mxu0 0.0
  %1447 = vmatpush1.msra.mxu0 0.0
  %1448 = vmatprep.subr.mxu0 0.0
  %1449 = vmatpush1.msra.mxu0 0.0
  %1450 = vmatprep.subr.mxu0 0.0
  %1451 = vmatpush1.msra.mxu0 0.0
  %1452 = vmatprep.mubr.f32.mxu0 0.0
  %1453 = vmatmul.mubr.f32.gmra.mrb[0].mxu0 %v1310
  %v1454 = vpop.f32.mrb[0].mxu0
  %v1455 = vadd.f32 0.0, %v1454
  %v1456 = vpop.f32.mrb[0].mxu0
  %v1457 = vadd.f32 0.0, %v1456
  %1458 = vdwg.mxu0
  %v1459 = vadd.f32 %v1313, %v1384
  %v1460 = vadd.f32 %v1314, %v1386
  %v1461 = vadd.f32 %v1315, %v1455
  %v1462 = vadd.f32 %v1316, %v1457
  %v1463 = vxor.u32 %v1459, 2147483648
  %v1464 = vxor.u32 %v1460, 2147483648
  %v1465 = vxor.u32 %v1461, 2147483648
  %v1466 = vmul.f32 %v1463, 1.442695
  %v1467 = vpow.pop %v1466
  %v1468 = vmul.f32 %v1464, 1.442695
  %v1469 = vpow.pop %v1468
  %v1470 = vmul.f32 %v1465, 1.442695
  %v1471 = vpow.pop %v1470
  %v1472 = vadd.f32 %v1467, 1.0
  %v1473 = vadd.f32 %v1469, 1.0
  %v1474 = vadd.f32 %v1471, 1.0
  %v1475 = vrcp.pop %v1472
  %v1476 = vmul.f32 1.0, %v1475
  %v1477 = vrcp.pop %v1473
  %v1478 = vmul.f32 1.0, %v1477
  %v1479 = vrcp.pop %v1474
  %v1480 = vmul.f32 1.0, %v1479
  %v1481 = vtanh.pop %v1462
  %v1482 = vmul.f32 %v1478, %v1308
  %v1483 = vmul.f32 %v1476, %v1481
  %v1484 = vadd.f32 %v1482, %v1483
  %v1485 = vtanh.pop %v1484
  %v1486 = vmul.f32 %v1480, %v1485
  %v1487 = vadd.f32 %v1311, %v1486
  %v1488 = vld [vmem:[%s2] sm:$0xff]
  %v1489 = vld [vmem:[%s2 + $0x8] sm:$0xff]
  %v1490 = vld [vmem:[%s2 + $0x10] sm:$0xff]
  %v1491 = vld [vmem:[%s2 + $0x18] sm:$0xff]
  %v1492 = vld [vmem:[%s2 + $0x20] sm:$0xff]
  %v1493 = vld [vmem:[%s2 + $0x28] sm:$0xff]
  %v1494 = vld [vmem:[%s2 + $0x30] sm:$0xff]
  %v1495 = vld [vmem:[%s2 + $0x38] sm:$0xff]
  %v1496 = vld [vmem:[%s2 + $0x40] sm:$0xff]
  %v1497 = vld [vmem:[%s2 + $0x48] sm:$0xff]
  %v1498 = vld [vmem:[%s2 + $0x50] sm:$0xff]
  %v1499 = vld [vmem:[%s2 + $0x58] sm:$0xff]
  %v1500 = vld [vmem:[%s2 + $0x60] sm:$0xff]
  %v1501 = vld [vmem:[%s2 + $0x68] sm:$0xff]
  %v1502 = vld [vmem:[%s2 + $0x70] sm:$0xff]
  %v1503 = vld [vmem:[%s2 + $0x78] sm:$0xff]
  %v1504 = vld [vmem:[%s3] sm:$0x1]
  %v1506 = vlaneseq
  %v1507 = vshrl.u32 %v1506, 7
  %v1508 = vsub.s32 0, %v1507
  %v1509 = vrot.slane %v1504, %v1508
  %1511 = vmatprep.subr.mxu0 0.0
  %1512 = vmatpush1.msra.mxu0 %v1488
  %1513 = vmatprep.subr.mxu0 0.0
  %1514 = vmatpush1.msra.mxu0 %v1489
  %1515 = vmatprep.subr.mxu0 0.0
  %1516 = vmatpush1.msra.mxu0 %v1490
  %1517 = vmatprep.subr.mxu0 0.0
  %1518 = vmatpush1.msra.mxu0 %v1491
  %1519 = vmatprep.subr.mxu0 0.0
  %1520 = vmatpush1.msra.mxu0 %v1492
  %1521 = vmatprep.subr.mxu0 0.0
  %1522 = vmatpush1.msra.mxu0 %v1493
  %1523 = vmatprep.subr.mxu0 0.0
  %1524 = vmatpush1.msra.mxu0 %v1494
  %1525 = vmatprep.subr.mxu0 0.0
  %1526 = vmatpush1.msra.mxu0 %v1495
  %1527 = vmatprep.subr.mxu0 0.0
  %1528 = vmatpush1.msra.mxu0 %v1496
  %1529 = vmatprep.subr.mxu0 0.0
  %1530 = vmatpush1.msra.mxu0 %v1497
  %1531 = vmatprep.subr.mxu0 0.0
  %1532 = vmatpush1.msra.mxu0 %v1498
  %1533 = vmatprep.subr.mxu0 0.0
  %1534 = vmatpush1.msra.mxu0 %v1499
  %1535 = vmatprep.subr.mxu0 0.0
  %1536 = vmatpush1.msra.mxu0 %v1500
  %1537 = vmatprep.subr.mxu0 0.0
  %1538 = vmatpush1.msra.mxu0 %v1501
  %1539 = vmatprep.subr.mxu0 0.0
  %1540 = vmatpush1.msra.mxu0 %v1502
  %1541 = vmatprep.subr.mxu0 0.0
  %1542 = vmatpush1.msra.mxu0 %v1503
  %1543 = vmatprep.subr.mxu0 0.0
  %1544 = vmatpush1.msra.mxu0 0.0
  %1545 = vmatprep.subr.mxu0 0.0
  %1546 = vmatpush1.msra.mxu0 0.0
  %1547 = vmatprep.subr.mxu0 0.0
  %1548 = vmatpush1.msra.mxu0 0.0
  %1549 = vmatprep.subr.mxu0 0.0
  %1550 = vmatpush1.msra.mxu0 0.0
  %1551 = vmatprep.subr.mxu0 0.0
  %1552 = vmatpush1.msra.mxu0 0.0
  %1553 = vmatprep.subr.mxu0 0.0
  %1554 = vmatpush1.msra.mxu0 0.0
  %1555 = vmatprep.subr.mxu0 0.0
  %1556 = vmatpush1.msra.mxu0 0.0
  %1557 = vmatprep.subr.mxu0 0.0
  %1558 = vmatpush1.msra.mxu0 0.0
  %1559 = vmatprep.subr.mxu0 0.0
  %1560 = vmatpush1.msra.mxu0 0.0
  %1561 = vmatprep.subr.mxu0 0.0
  %1562 = vmatpush1.msra.mxu0 0.0
  %1563 = vmatprep.subr.mxu0 0.0
  %1564 = vmatpush1.msra.mxu0 0.0
  %1565 = vmatprep.subr.mxu0 0.0
  %1566 = vmatpush1.msra.mxu0 0.0
  %1567 = vmatprep.subr.mxu0 0.0
  %1568 = vmatpush1.msra.mxu0 0.0
  %1569 = vmatprep.subr.mxu0 0.0
  %1570 = vmatpush1.msra.mxu0 0.0
  %1571 = vmatprep.subr.mxu0 0.0
  %1572 = vmatpush1.msra.mxu0 0.0
  %1573 = vmatprep.subr.mxu0 0.0
  %1574 = vmatpush1.msra.mxu0 0.0
  %1575 = vmatprep.mubr.f32.mxu0 0.0
  %1576 = vmatmul.mubr.f32.gmra.mrb[0].mxu0 %v1487
  %v1577 = vpop.f32.mrb[0].mxu0
  %v1578 = vadd.f32 %v1509, %v1577
  %v1579 = vpop.f32.mrb[0].mxu0
  %1580 = vdwg.mxu0
  %1581 = vmax.xlane.f32.xlu0 %v1578
  %v1582 = vpop.xlane.xlu0 %1581
  %v1583 = vsub.f32 %v1578, %v1582
  %v1584 = vmul.f32 %v1583, 1.442695
  %v1585 = vpow.pop %v1584
  %1586 = vadd.xlane.f32.xlu0 %v1585
  %v1587 = vpop.xlane.xlu0 %1586
  %v1588 = vrcp.pop %v1587
  %v1589 = vmul.f32 %v1585, %v1588
  %1590 = vst [vmem:[%s4] sm:$0xff] %v1589
  // Predicated region
  $region18: #{lstm_forward.1} parent=0 // pred_check
    _
  $region19: #{lstm_forward.1} parent=0 // pred_check_branch
    %1592 = sbr.rel (0) target = $region21
  $region20: #{lstm_forward.1} parent=0 // pred_region
    _
  $region21: #{lstm_forward.1} parent=0 // pred_fallthru
    _
  // Predicated region
  $region22: #{lstm_forward.1} parent=0 // pred_check
    _
  $region23: #{lstm_forward.1} parent=0 // pred_check_branch
    %1594 = sbr.rel (0) target = $region25
  $region24: #{lstm_forward.1} parent=0 // pred_region
    _
  $region25: #{lstm_forward.1} parent=0 // pred_fallthru
    _

</llo_original>
